<compile_context>
chip_gen: v7x
topology: tpu7x:2x2x1
jax: 0.10.0
libtpu: 0.0.40
codegen_flags: <defaults>
</compile_context>

<pallas_src>
import functools

import jax
import jax.numpy as jnp
from jax import lax
from jax.experimental import pallas as pl
from jax.experimental.pallas import tpu as pltpu


# ---------------------------------------------------------------------------
# VMEM budgeting / tile pickers / chip detection
# ---------------------------------------------------------------------------
def _vmem_cap():
    try:
        cap = int(pltpu.get_tpu_info().vmem_capacity_bytes)
    except Exception:
        cap = 64 << 20                      # conservative fallback (v7x per-TC size)
    return int(cap * 0.8)                   # ~20% headroom for compiler scratch / pipelining


def _vmem_limit(need_bytes):
    return int(min(max(int(need_bytes) + (4 << 20), 16 << 20), _vmem_cap()))


def _use_bf16_exp():
    # bf16 EUP/VPU exist on v6e/v7x; keep the f32 exp path on v5-class and older parts.
    try:
        kind = jax.devices()[0].device_kind.lower()
    except Exception:
        return False
    return ("v6" in kind) or ("v7" in kind)


def _pick_query_tile(n):
    # keep the per-tile (N, tq) logits/probs footprint around ~12 MiB
    budget = max(128, (12 << 20) // max(1, 10 * n))
    for t in (1024, 512, 256, 128):
        if n % t == 0 and t <= budget:
            return t
    return n


def _pick_bn_tile(n, c):
    budget = max(128, (16 << 20) // max(1, 16 * c))
    for t in (8192, 4096, 2048, 1024, 512, 256, 128):
        if n % t == 0 and t <= budget:
            return t
    return n


# ---------------------------------------------------------------------------
# Kernel 1: fused q/k/v projection (MXU, bf16) + positional encoding (VPU)
# ---------------------------------------------------------------------------
def _proj_kernel(feat_ref, xyzt_ref, wqkv_ref, bqkv_ref, wp_ref, q_ref, kv_ref):
    f = feat_ref[0]                               # (C, N) f32
    C, N = f.shape

    # Stacked projection in bf16 (f32 accumulate). Rows [0:C)=q (pre-scaled by 1/sqrt(C)),
    # [C:2C)=k, [2C:3C)=v (bias already includes the pos-conv bias).
    qkv = jnp.dot(wqkv_ref[...], f.astype(jnp.bfloat16),
                  preferred_element_type=jnp.float32) + bqkv_ref[...]

    # Positional encoding: contraction depth 3 would waste the MXU -> 3 broadcast FMAs.
    wp = wp_ref[...]                              # (C, 3)
    x = xyzt_ref[0]                               # (3, N)
    pos = (wp[:, 0:1] * x[0:1, :]
           + wp[:, 1:2] * x[1:2, :]
           + wp[:, 2:3] * x[2:3, :])              # (C, N)

    q_ref[0] = qkv[:C].astype(jnp.bfloat16)
    # [k ; v+pos ; ones] -- the ones row turns the softmax col_sum into a free MXU output row.
    kv = jnp.concatenate([qkv[C:2 * C],
                          qkv[2 * C:] + pos,
                          jnp.ones((1, N), jnp.float32)], axis=0)     # (2C+1, N)
    kv_ref[0] = kv.astype(jnp.bfloat16)


# ---------------------------------------------------------------------------
# Kernel 2: query-tiled attention + residual + packed BN partial statistics
# ---------------------------------------------------------------------------
def _attn_kernel(use_bf16_exp, feat_ref, q_ref, kv_ref, y_ref, stats_ref):
    C = feat_ref.shape[1]

    q_t = q_ref[0]                                # (C, tq)  bf16, pre-scaled by 1/sqrt(C)
    k = kv_ref[0, :C, :]                          # (C, N)   bf16
    vpa = kv_ref[0, C:, :]                        # (C+1, N) bf16   (last row = ones)

    # logits[m, n] = sum_c k[c, m] * q[c, n]  -> (N_key, tq); softmax over the key axis.
    logits = lax.dot_general(k, q_t, (((0,), (0,)), ((), ())),
                             preferred_element_type=jnp.float32)
    m_col = jnp.max(logits, axis=0, keepdims=True)            # (1, tq)
    z = logits - m_col
    if use_bf16_exp:
        p = jnp.exp(z.astype(jnp.bfloat16))                   # bf16 EUP (v6e/v7x)
    else:
        p = jnp.exp(z).astype(jnp.bfloat16)                   # f32 EUP path (v5-class)

    # att[:C] = unnormalized attended (v+pos); att[C] = col_sum -- one MXU pass, no transpose.
    att = jnp.dot(vpa, p, preferred_element_type=jnp.float32)  # (C+1, tq)
    inv = pl.reciprocal(att[C:C + 1, :], approx=True)          # EUP slot, nearly free
    y = att[:C, :] * inv + feat_ref[0]                         # normalize + residual

    y_ref[0] = y
    # Packed per-(batch, query-tile) BN partial sums: [:, 0]=sum(y), [:, 1]=sum(y^2).
    stats_ref[0, 0] = jnp.concatenate(
        [jnp.sum(y, axis=1, keepdims=True),
         jnp.sum(y * y, axis=1, keepdims=True)], axis=1)       # (C, 2)


# ---------------------------------------------------------------------------
# Kernel 3: BatchNorm (pre-folded scale/shift) + ReLU, in-place over y
# ---------------------------------------------------------------------------
def _bn_relu_kernel(y_ref, scale_ref, shift_ref, o_ref):
    o_ref[0] = jnp.maximum(y_ref[0] * scale_ref[...] + shift_ref[...], 0.0)


# ---------------------------------------------------------------------------
# Wrapper
# ---------------------------------------------------------------------------
@jax.jit
def offset_attention(xyz, features, params):
    B, C, N = features.shape
    f32, bf16 = jnp.float32, jnp.bfloat16

    # ---- fold / stack parameters (tiny O(C^2) wrapper-side ops) ----
    inv_sqrt_c = 1.0 / (C ** 0.5)
    w_qkv = jnp.concatenate([params["wq"] * inv_sqrt_c,        # fold 1/sqrt(C) into q rows
                             params["wk"],
                             params["wv"]], axis=0).astype(bf16)          # (3C, C) bf16
    b_qkv = jnp.concatenate([params["bq"] * inv_sqrt_c,
                             params["bk"],
                             params["bv"] + params["bp"]], axis=0)        # (3C, 1) f32
    wp = params["wp"]                                                     # (C, 3)
    xyz_t = jnp.transpose(xyz, (0, 2, 1))                                 # (B, 3, N)

    # ---- Kernel 1: projection ----
    proj_need = (2 * C * N * 4 + 2 * 3 * N * 4            # feat / xyz blocks (double-buffered)
                 + 3 * C * C * 2 * 2 + 3 * C * 4          # weights / bias
                 + 5 * C * N * 4                          # qkv / pos f32 temporaries
                 + 3 * (3 * C + 1) * N * 2)               # bf16 outputs (double-buffered)
    q_bf, kv_bf = pl.pallas_call(
        _proj_kernel,
        out_shape=(jax.ShapeDtypeStruct((B, C, N), bf16),
                   jax.ShapeDtypeStruct((B, 2 * C + 1, N), bf16)),
        grid=(B,),
        in_specs=[pl.BlockSpec((1, C, N), lambda b: (b, 0, 0)),
                  pl.BlockSpec((1, 3, N), lambda b: (b, 0, 0)),
                  pl.BlockSpec((3 * C, C), lambda b: (0, 0)),
                  pl.BlockSpec((3 * C, 1), lambda b: (0, 0)),
                  pl.BlockSpec((C, 3), lambda b: (0, 0))],
        out_specs=(pl.BlockSpec((1, C, N), lambda b: (b, 0, 0)),
                   pl.BlockSpec((1, 2 * C + 1, N), lambda b: (b, 0, 0))),
        compiler_params=pltpu.CompilerParams(
            dimension_semantics=("parallel",),
            vmem_limit_bytes=_vmem_limit(proj_need)),
    )(features, xyz_t, w_qkv, b_qkv, wp)

    # ---- Kernel 2: query-tiled attention ----
    tq = _pick_query_tile(N)
    nq = N // tq
    attn_need = (2 * (2 * C + 1) * N * 2                   # resident [k; vp; ones]
                 + 2 * C * tq * 2                          # q tile
                 + 4 * C * tq * 4                          # feature tile + y tile
                 + N * tq * 8                              # logits f32 + probs bf16 + slack
                 + 2 * (C + 1) * tq * 4)                   # att
    y, stats = pl.pallas_call(
        functools.partial(_attn_kernel, _use_bf16_exp()),
        out_shape=(jax.ShapeDtypeStruct((B, C, N), f32),
                   jax.ShapeDtypeStruct((B, nq, C, 2), f32)),
        grid=(B, nq),
        in_specs=[pl.BlockSpec((1, C, tq), lambda b, t: (b, 0, t)),        # features (residual)
                  pl.BlockSpec((1, C, tq), lambda b, t: (b, 0, t)),        # q tile
                  pl.BlockSpec((1, 2 * C + 1, N), lambda b, t: (b, 0, 0))],  # k/vp/ones (resident)
        out_specs=(pl.BlockSpec((1, C, tq), lambda b, t: (b, 0, t)),
                   pl.BlockSpec((1, 1, C, 2), lambda b, t: (b, t, 0, 0))),
        compiler_params=pltpu.CompilerParams(
            dimension_semantics=("parallel", "parallel"),
            vmem_limit_bytes=_vmem_limit(attn_need)),
    )(features, q_bf, kv_bf)

    # ---- BatchNorm1d (training-mode batch stats) folded into per-channel scale/shift ----
    cnt = float(B * N)
    tot = jnp.sum(stats, axis=(0, 1))                      # (C, 2)
    mean = tot[:, 0] / cnt
    var = jnp.maximum(tot[:, 1] / cnt - mean * mean, 0.0)  # guard E[y^2]-E[y]^2 cancellation
    rstd = lax.rsqrt(var + 1e-5)
    g = params["gamma"].reshape(-1)
    be = params["beta"].reshape(-1)
    scale = (g * rstd).reshape(C, 1).astype(f32)
    shift = (be - mean * g * rstd).reshape(C, 1).astype(f32)

    # ---- Kernel 3: BN + ReLU (in-place over y) ----
    n_tile = _pick_bn_tile(N, C)
    bn_need = 4 * C * n_tile * 4 + 4 * C * 4
    out = pl.pallas_call(
        _bn_relu_kernel,
        out_shape=jax.ShapeDtypeStruct((B, C, N), f32),
        grid=(B, N // n_tile),
        in_specs=[pl.BlockSpec((1, C, n_tile), lambda b, t: (b, 0, t)),
                  pl.BlockSpec((C, 1), lambda b, t: (0, 0)),
                  pl.BlockSpec((C, 1), lambda b, t: (0, 0))],
        out_specs=pl.BlockSpec((1, C, n_tile), lambda b, t: (b, 0, t)),
        input_output_aliases={0: 0},                       # overwrite y in place
        compiler_params=pltpu.CompilerParams(
            dimension_semantics=("parallel", "parallel"),
            vmem_limit_bytes=_vmem_limit(bn_need)),
    )(y, scale, shift)
    return out


# ---------------------------------------------------------------------------
# Pure-JAX reference mirroring the PyTorch forward (training-mode BatchNorm)
# ---------------------------------------------------------------------------
def _reference(xyz, features, params):
    B, C, N = features.shape

    def conv1x1(w, b, x):   # x: (B, Cin, N)
        return jnp.einsum("oi,bin->bon", w, x) + b.reshape(1, -1, 1)

    q = conv1x1(params["wq"], params["bq"][:, 0], features).transpose(0, 2, 1)  # (B,N,C)
    k = conv1x1(params["wk"], params["bk"][:, 0], features)                     # (B,C,N)
    v = conv1x1(params["wv"], params["bv"][:, 0], features)
    pos = conv1x1(params["wp"], params["bp"][:, 0], xyz.transpose(0, 2, 1))     # (B,C,N)
    attn = jnp.einsum("bnc,bcm->bnm", q, k) / (C ** 0.5)
    attn = jax.nn.softmax(attn, axis=-1)
    av = jnp.einsum("bcm,bnm->bcn", v, attn)
    ap = jnp.einsum("bcm,bnm->bcn", pos, attn)
    y = av + ap + features
    mean = jnp.mean(y, axis=(0, 2), keepdims=True)
    var = jnp.mean((y - mean) ** 2, axis=(0, 2), keepdims=True)
    y = (y - mean) / jnp.sqrt(var + 1e-5)
    y = y * params["gamma"].reshape(1, -1, 1) + params["beta"].reshape(1, -1, 1)
    return jnp.maximum(y, 0.0)


def init_params(key, channels):
    ks = jax.random.split(key, 8)

    def u(k, shape, fan_in):
        bound = 1.0 / (fan_in ** 0.5)
        return jax.random.uniform(k, shape, jnp.float32, -bound, bound)

    C = channels
    return {
        "wq": u(ks[0], (C, C), C), "bq": u(ks[1], (C, 1), C),
        "wk": u(ks[2], (C, C), C), "bk": u(ks[3], (C, 1), C),
        "wv": u(ks[4], (C, C), C), "bv": u(ks[5], (C, 1), C),
        "wp": u(ks[6], (C, 3), 3), "bp": u(ks[7], (C, 1), 3),
        "gamma": jnp.ones((1, C), jnp.float32),   # BatchNorm1d default init
        "beta": jnp.zeros((1, C), jnp.float32),
    }


if __name__ == "__main__":
    # N multiple of 128 / C multiple of 8 so every tile and store is lane/sublane aligned.
    B, C, N = 2, 32, 128
    key = jax.random.PRNGKey(0)
    k_xyz, k_feat, k_param = jax.random.split(key, 3)
    xyz = jax.random.normal(k_xyz, (B, N, 3), jnp.float32)
    features = jax.random.normal(k_feat, (B, C, N), jnp.float32)
    params = init_params(k_param, C)

    out = jax.block_until_ready(offset_attention(xyz, features, params))
    ref = _reference(xyz, features, params)

    assert out.shape == (B, C, N)
    max_err = float(jnp.max(jnp.abs(out - ref)))
    # bf16 MXU operands, (optionally) bf16 exp and approx reciprocal => loosened tolerance.
    assert jnp.allclose(out, ref, atol=5e-2, rtol=5e-2), max_err
    print("KERNEL_OK")
</pallas_src>

<mosaic_0001>
module attributes {stable_mosaic.version = 11 : i64} {
  func.func @_attn_kernel(%arg0: i32, %arg1: i32, %arg2: memref<1x32x128xf32, #tpu.memory_space<vmem>>, %arg3: memref<1x32x128xbf16, #tpu.memory_space<vmem>>, %arg4: memref<1x65x128xbf16, #tpu.memory_space<vmem>>, %arg5: memref<1x32x128xf32, #tpu.memory_space<vmem>>, %arg6: memref<1x1x32x2xf32, #tpu.memory_space<vmem>>) attributes {dimension_semantics = [#tpu.dimension_semantics<parallel>, #tpu.dimension_semantics<parallel>], iteration_bounds = array<i64: 2, 1>, scalar_prefetch = 0 : i64, scratch_operands = 0 : i64, tpu.core_type = #tpu.core_type<tc>, window_params = [{transform_indices = @transform_0, window_bounds = array<i64: 1, 32, 128>}, {transform_indices = @transform_1, window_bounds = array<i64: 1, 32, 128>}, {transform_indices = @transform_2, window_bounds = array<i64: 1, 65, 128>}, {transform_indices = @transform_3, window_bounds = array<i64: 1, 32, 128>}, {transform_indices = @transform_4, window_bounds = array<i64: 1, 1, 32, 2>}]} {
    %c0 = arith.constant 0 : index
    %c0_0 = arith.constant 0 : index
    %c0_1 = arith.constant 0 : index
    %0 = vector.load %arg3[%c0, %c0_0, %c0_1] : memref<1x32x128xbf16, #tpu.memory_space<vmem>>, vector<1x32x128xbf16>
    %1 = vector.shape_cast %0 : vector<1x32x128xbf16> to vector<32x128xbf16>
    %c0_2 = arith.constant 0 : index
    %c0_3 = arith.constant 0 : index
    %c0_4 = arith.constant 0 : index
    %2 = vector.load %arg4[%c0_2, %c0_3, %c0_4] : memref<1x65x128xbf16, #tpu.memory_space<vmem>>, vector<1x32x128xbf16>
    %3 = vector.shape_cast %2 : vector<1x32x128xbf16> to vector<32x128xbf16>
    %c0_5 = arith.constant 0 : index
    %c32 = arith.constant 32 : index
    %c0_6 = arith.constant 0 : index
    %4 = vector.load %arg4[%c0_5, %c32, %c0_6] : memref<1x65x128xbf16, #tpu.memory_space<vmem>>, vector<1x33x128xbf16>
    %5 = vector.shape_cast %4 : vector<1x33x128xbf16> to vector<33x128xbf16>
    %cst = arith.constant dense<0.000000e+00> : vector<128x128xf32>
    %6 = tpu.matmul %3, %1, %cst {dimension_numbers = #tpu.dot_dimension_numbers<[0], [0], [1], [1], [0, 1, 1, 1], [], []>} : vector<32x128xbf16>, vector<32x128xbf16>, vector<128x128xf32> -> vector<128x128xf32>
    %cst_7 = arith.constant dense<0xFF800000> : vector<128xf32>
    %7 = vector.multi_reduction <maximumf>, %6, %cst_7 [0] : vector<128x128xf32> to vector<128xf32>
    %8 = vector.shape_cast %7 : vector<128xf32> to vector<1x128xf32>
    %9 = vector.broadcast %8 : vector<1x128xf32> to vector<128x128xf32>
    %10 = arith.subf %6, %9 : vector<128x128xf32>
    %11 = math.exp %10 : vector<128x128xf32>
    %12 = arith.truncf %11 : vector<128x128xf32> to vector<128x128xbf16>
    %cst_8 = arith.constant dense<0.000000e+00> : vector<33x128xf32>
    %13 = tpu.matmul %5, %12, %cst_8 {dimension_numbers = #tpu.dot_dimension_numbers<[1], [0], [0], [1], [0, 0, 1, 1], [], []>} : vector<33x128xbf16>, vector<128x128xbf16>, vector<33x128xf32> -> vector<33x128xf32>
    %14 = vector.extract_strided_slice %13 {offsets = [32, 0], sizes = [1, 128], strides = [1, 1]} : vector<33x128xf32> to vector<1x128xf32>
    %15 = tpu.reciprocal %14 {approx = true} : vector<1x128xf32> -> vector<1x128xf32>
    %16 = vector.extract_strided_slice %13 {offsets = [0, 0], sizes = [32, 128], strides = [1, 1]} : vector<33x128xf32> to vector<32x128xf32>
    %17 = vector.broadcast %15 : vector<1x128xf32> to vector<32x128xf32>
    %18 = arith.mulf %16, %17 : vector<32x128xf32>
    %c0_9 = arith.constant 0 : index
    %c0_10 = arith.constant 0 : index
    %c0_11 = arith.constant 0 : index
    %19 = vector.load %arg2[%c0_9, %c0_10, %c0_11] : memref<1x32x128xf32, #tpu.memory_space<vmem>>, vector<1x32x128xf32>
    %20 = vector.shape_cast %19 : vector<1x32x128xf32> to vector<32x128xf32>
    %21 = arith.addf %18, %20 : vector<32x128xf32>
    %c0_12 = arith.constant 0 : index
    %c0_13 = arith.constant 0 : index
    %c0_14 = arith.constant 0 : index
    %22 = vector.load %arg5[%c0_12, %c0_13, %c0_14] : memref<1x32x128xf32, #tpu.memory_space<vmem>>, vector<1x32x128xf32>
    %23 = vector.shape_cast %22 : vector<1x32x128xf32> to vector<32x128xf32>
    %24 = vector.shape_cast %21 : vector<32x128xf32> to vector<1x32x128xf32>
    tpu.vector_store %arg5[%c0_12, %c0_13, %c0_14], %24 {strides = array<i32>} : memref<1x32x128xf32, #tpu.memory_space<vmem>>, vector<1x32x128xf32>,
    %cst_15 = arith.constant dense<0.000000e+00> : vector<32xf32>
    %25 = vector.multi_reduction <add>, %21, %cst_15 [1] : vector<32x128xf32> to vector<32xf32>
    %26 = vector.shape_cast %25 : vector<32xf32> to vector<32x1xf32>
    %27 = arith.mulf %21, %21 : vector<32x128xf32>
    %cst_16 = arith.constant dense<0.000000e+00> : vector<32xf32>
    %28 = vector.multi_reduction <add>, %27, %cst_16 [1] : vector<32x128xf32> to vector<32xf32>
    %29 = vector.shape_cast %28 : vector<32xf32> to vector<32x1xf32>
    %30 = tpu.concatenate %26, %29 in 1 : vector<32x1xf32>, vector<32x1xf32> -> vector<32x2xf32>
    %c0_17 = arith.constant 0 : index
    %c0_18 = arith.constant 0 : index
    %c0_19 = arith.constant 0 : index
    %c0_20 = arith.constant 0 : index
    %31 = vector.load %arg6[%c0_17, %c0_18, %c0_19, %c0_20] : memref<1x1x32x2xf32, #tpu.memory_space<vmem>>, vector<1x1x32x2xf32>
    %32 = vector.shape_cast %31 : vector<1x1x32x2xf32> to vector<32x2xf32>
    %33 = vector.shape_cast %30 : vector<32x2xf32> to vector<1x1x32x2xf32>
    tpu.vector_store %arg6[%c0_17, %c0_18, %c0_19, %c0_20], %33 {strides = array<i32>} : memref<1x1x32x2xf32, #tpu.memory_space<vmem>>, vector<1x1x32x2xf32>,
    return
  }
  func.func @transform_0(%arg0: i32, %arg1: i32) -> (i32, i32, i32) {
    %c0_i32 = arith.constant 0 : i32
    %c0_i32_0 = arith.constant 0 : i32
    return %arg0, %c0_i32, %arg1 : i32, i32, i32
  }
  func.func @transform_1(%arg0: i32, %arg1: i32) -> (i32, i32, i32) {
    %c0_i32 = arith.constant 0 : i32
    %c0_i32_0 = arith.constant 0 : i32
    return %arg0, %c0_i32, %arg1 : i32, i32, i32
  }
  func.func @transform_2(%arg0: i32, %arg1: i32) -> (i32, i32, i32) {
    %c0_i32 = arith.constant 0 : i32
    %c0_i32_0 = arith.constant 0 : i32
    %c0_i32_1 = arith.constant 0 : i32
    return %arg0, %c0_i32, %c0_i32_0 : i32, i32, i32
  }
  func.func @transform_3(%arg0: i32, %arg1: i32) -> (i32, i32, i32) {
    %c0_i32 = arith.constant 0 : i32
    %c0_i32_0 = arith.constant 0 : i32
    return %arg0, %c0_i32, %arg1 : i32, i32, i32
  }
  func.func @transform_4(%arg0: i32, %arg1: i32) -> (i32, i32, i32, i32) {
    %c0_i32 = arith.constant 0 : i32
    %c0_i32_0 = arith.constant 0 : i32
    %c0_i32_1 = arith.constant 0 : i32
    return %arg0, %arg1, %c0_i32, %c0_i32_0 : i32, i32, i32, i32
  }
}

module attributes {stable_mosaic.version = 11 : i64} {
  func.func @_proj_kernel(%arg0: i32, %arg1: memref<1x32x128xf32, #tpu.memory_space<vmem>>, %arg2: memref<1x3x128xf32, #tpu.memory_space<vmem>>, %arg3: memref<96x32xbf16, #tpu.memory_space<vmem>>, %arg4: memref<96x1xf32, #tpu.memory_space<vmem>>, %arg5: memref<32x3xf32, #tpu.memory_space<vmem>>, %arg6: memref<1x32x128xbf16, #tpu.memory_space<vmem>>, %arg7: memref<1x65x128xbf16, #tpu.memory_space<vmem>>) attributes {dimension_semantics = [#tpu.dimension_semantics<parallel>], iteration_bounds = array<i64: 2>, scalar_prefetch = 0 : i64, scratch_operands = 0 : i64, tpu.core_type = #tpu.core_type<tc>, window_params = [{transform_indices = @transform_0, window_bounds = array<i64: 1, 32, 128>}, {transform_indices = @transform_1, window_bounds = array<i64: 1, 3, 128>}, {pipeline_mode = #tpu.pipeline_mode<synchronous>, transform_indices = @transform_2, window_bounds = array<i64: 96, 32>}, {pipeline_mode = #tpu.pipeline_mode<synchronous>, transform_indices = @transform_3, window_bounds = array<i64: 96, 1>}, {pipeline_mode = #tpu.pipeline_mode<synchronous>, transform_indices = @transform_4, window_bounds = array<i64: 32, 3>}, {transform_indices = @transform_5, window_bounds = array<i64: 1, 32, 128>}, {transform_indices = @transform_6, window_bounds = array<i64: 1, 65, 128>}]} {
    %c0 = arith.constant 0 : index
    %c0_0 = arith.constant 0 : index
    %c0_1 = arith.constant 0 : index
    %0 = vector.load %arg1[%c0, %c0_0, %c0_1] : memref<1x32x128xf32, #tpu.memory_space<vmem>>, vector<1x32x128xf32>
    %1 = vector.shape_cast %0 : vector<1x32x128xf32> to vector<32x128xf32>
    %c0_2 = arith.constant 0 : index
    %c0_3 = arith.constant 0 : index
    %2 = vector.load %arg3[%c0_2, %c0_3] : memref<96x32xbf16, #tpu.memory_space<vmem>>, vector<96x32xbf16>
    %3 = arith.truncf %1 : vector<32x128xf32> to vector<32x128xbf16>
    %cst = arith.constant dense<0.000000e+00> : vector<96x128xf32>
    %4 = tpu.matmul %2, %3, %cst {dimension_numbers = #tpu.dot_dimension_numbers<[1], [0], [0], [1], [0, 0, 1, 1], [], []>} : vector<96x32xbf16>, vector<32x128xbf16>, vector<96x128xf32> -> vector<96x128xf32>
    %c0_4 = arith.constant 0 : index
    %c0_5 = arith.constant 0 : index
    %5 = vector.load %arg4[%c0_4, %c0_5] : memref<96x1xf32, #tpu.memory_space<vmem>>, vector<96x1xf32>
    %6 = vector.broadcast %5 : vector<96x1xf32> to vector<96x128xf32>
    %7 = arith.addf %4, %6 : vector<96x128xf32>
    %c0_6 = arith.constant 0 : index
    %c0_7 = arith.constant 0 : index
    %8 = vector.load %arg5[%c0_6, %c0_7] : memref<32x3xf32, #tpu.memory_space<vmem>>, vector<32x3xf32>
    %c0_8 = arith.constant 0 : index
    %c0_9 = arith.constant 0 : index
    %c0_10 = arith.constant 0 : index
    %9 = vector.load %arg2[%c0_8, %c0_9, %c0_10] : memref<1x3x128xf32, #tpu.memory_space<vmem>>, vector<1x3x128xf32>
    %10 = vector.shape_cast %9 : vector<1x3x128xf32> to vector<3x128xf32>
    %11 = vector.extract_strided_slice %8 {offsets = [0, 0], sizes = [32, 1], strides = [1, 1]} : vector<32x3xf32> to vector<32x1xf32>
    %12 = vector.extract_strided_slice %10 {offsets = [0, 0], sizes = [1, 128], strides = [1, 1]} : vector<3x128xf32> to vector<1x128xf32>
    %13 = vector.broadcast %11 : vector<32x1xf32> to vector<32x128xf32>
    %14 = vector.broadcast %12 : vector<1x128xf32> to vector<32x128xf32>
    %15 = arith.mulf %13, %14 : vector<32x128xf32>
    %16 = vector.extract_strided_slice %8 {offsets = [0, 1], sizes = [32, 1], strides = [1, 1]} : vector<32x3xf32> to vector<32x1xf32>
    %17 = vector.extract_strided_slice %10 {offsets = [1, 0], sizes = [1, 128], strides = [1, 1]} : vector<3x128xf32> to vector<1x128xf32>
    %18 = vector.broadcast %16 : vector<32x1xf32> to vector<32x128xf32>
    %19 = vector.broadcast %17 : vector<1x128xf32> to vector<32x128xf32>
    %20 = arith.mulf %18, %19 : vector<32x128xf32>
    %21 = arith.addf %15, %20 : vector<32x128xf32>
    %22 = vector.extract_strided_slice %8 {offsets = [0, 2], sizes = [32, 1], strides = [1, 1]} : vector<32x3xf32> to vector<32x1xf32>
    %23 = vector.extract_strided_slice %10 {offsets = [2, 0], sizes = [1, 128], strides = [1, 1]} : vector<3x128xf32> to vector<1x128xf32>
    %24 = vector.broadcast %22 : vector<32x1xf32> to vector<32x128xf32>
    %25 = vector.broadcast %23 : vector<1x128xf32> to vector<32x128xf32>
    %26 = arith.mulf %24, %25 : vector<32x128xf32>
    %27 = arith.addf %21, %26 : vector<32x128xf32>
    %28 = vector.extract_strided_slice %7 {offsets = [0, 0], sizes = [32, 128], strides = [1, 1]} : vector<96x128xf32> to vector<32x128xf32>
    %29 = arith.truncf %28 : vector<32x128xf32> to vector<32x128xbf16>
    %c0_11 = arith.constant 0 : index
    %c0_12 = arith.constant 0 : index
    %c0_13 = arith.constant 0 : index
    %30 = vector.load %arg6[%c0_11, %c0_12, %c0_13] : memref<1x32x128xbf16, #tpu.memory_space<vmem>>, vector<1x32x128xbf16>
    %31 = vector.shape_cast %30 : vector<1x32x128xbf16> to vector<32x128xbf16>
    %32 = vector.shape_cast %29 : vector<32x128xbf16> to vector<1x32x128xbf16>
    tpu.vector_store %arg6[%c0_11, %c0_12, %c0_13], %32 {strides = array<i32>} : memref<1x32x128xbf16, #tpu.memory_space<vmem>>, vector<1x32x128xbf16>,
    %33 = vector.extract_strided_slice %7 {offsets = [32, 0], sizes = [32, 128], strides = [1, 1]} : vector<96x128xf32> to vector<32x128xf32>
    %34 = vector.extract_strided_slice %7 {offsets = [64, 0], sizes = [32, 128], strides = [1, 1]} : vector<96x128xf32> to vector<32x128xf32>
    %35 = arith.addf %34, %27 : vector<32x128xf32>
    %cst_14 = arith.constant 1.000000e+00 : f32
    %36 = vector.broadcast %cst_14 : f32 to vector<1x128xf32>
    %37 = tpu.concatenate %33, %35, %36 in 0 : vector<32x128xf32>, vector<32x128xf32>, vector<1x128xf32> -> vector<65x128xf32>
    %38 = arith.truncf %37 : vector<65x128xf32> to vector<65x128xbf16>
    %c0_15 = arith.constant 0 : index
    %c0_16 = arith.constant 0 : index
    %c0_17 = arith.constant 0 : index
    %39 = vector.load %arg7[%c0_15, %c0_16, %c0_17] : memref<1x65x128xbf16, #tpu.memory_space<vmem>>, vector<1x65x128xbf16>
    %40 = vector.shape_cast %39 : vector<1x65x128xbf16> to vector<65x128xbf16>
    %41 = vector.shape_cast %38 : vector<65x128xbf16> to vector<1x65x128xbf16>
    tpu.vector_store %arg7[%c0_15, %c0_16, %c0_17], %41 {strides = array<i32>} : memref<1x65x128xbf16, #tpu.memory_space<vmem>>, vector<1x65x128xbf16>,
    return
  }
  func.func @transform_0(%arg0: i32) -> (i32, i32, i32) {
    %c0_i32 = arith.constant 0 : i32
    %c0_i32_0 = arith.constant 0 : i32
    %c0_i32_1 = arith.constant 0 : i32
    return %arg0, %c0_i32, %c0_i32_0 : i32, i32, i32
  }
  func.func @transform_1(%arg0: i32) -> (i32, i32, i32) {
    %c0_i32 = arith.constant 0 : i32
    %c0_i32_0 = arith.constant 0 : i32
    %c0_i32_1 = arith.constant 0 : i32
    return %arg0, %c0_i32, %c0_i32_0 : i32, i32, i32
  }
  func.func @transform_2(%arg0: i32) -> (i32, i32) {
    %c0_i32 = arith.constant 0 : i32
    %c0_i32_0 = arith.constant 0 : i32
    %c0_i32_1 = arith.constant 0 : i32
    return %c0_i32, %c0_i32_0 : i32, i32
  }
  func.func @transform_3(%arg0: i32) -> (i32, i32) {
    %c0_i32 = arith.constant 0 : i32
    %c0_i32_0 = arith.constant 0 : i32
    %c0_i32_1 = arith.constant 0 : i32
    return %c0_i32, %c0_i32_0 : i32, i32
  }
  func.func @transform_4(%arg0: i32) -> (i32, i32) {
    %c0_i32 = arith.constant 0 : i32
    %c0_i32_0 = arith.constant 0 : i32
    %c0_i32_1 = arith.constant 0 : i32
    return %c0_i32, %c0_i32_0 : i32, i32
  }
  func.func @transform_5(%arg0: i32) -> (i32, i32, i32) {
    %c0_i32 = arith.constant 0 : i32
    %c0_i32_0 = arith.constant 0 : i32
    %c0_i32_1 = arith.constant 0 : i32
    return %arg0, %c0_i32, %c0_i32_0 : i32, i32, i32
  }
  func.func @transform_6(%arg0: i32) -> (i32, i32, i32) {
    %c0_i32 = arith.constant 0 : i32
    %c0_i32_0 = arith.constant 0 : i32
    %c0_i32_1 = arith.constant 0 : i32
    return %arg0, %c0_i32, %c0_i32_0 : i32, i32, i32
  }
}

module attributes {stable_mosaic.version = 11 : i64} {
  func.func @_bn_relu_kernel(%arg0: i32, %arg1: i32, %arg2: memref<1x32x128xf32, #tpu.memory_space<vmem>>, %arg3: memref<32x1xf32, #tpu.memory_space<vmem>>, %arg4: memref<32x1xf32, #tpu.memory_space<vmem>>, %arg5: memref<1x32x128xf32, #tpu.memory_space<vmem>>) attributes {dimension_semantics = [#tpu.dimension_semantics<parallel>, #tpu.dimension_semantics<parallel>], iteration_bounds = array<i64: 2, 1>, scalar_prefetch = 0 : i64, scratch_operands = 0 : i64, tpu.core_type = #tpu.core_type<tc>, window_params = [{transform_indices = @transform_0, window_bounds = array<i64: 1, 32, 128>}, {pipeline_mode = #tpu.pipeline_mode<synchronous>, transform_indices = @transform_1, window_bounds = array<i64: 32, 1>}, {pipeline_mode = #tpu.pipeline_mode<synchronous>, transform_indices = @transform_2, window_bounds = array<i64: 32, 1>}, {transform_indices = @transform_3, window_bounds = array<i64: 1, 32, 128>}]} {
    %c0 = arith.constant 0 : index
    %c0_0 = arith.constant 0 : index
    %c0_1 = arith.constant 0 : index
    %0 = vector.load %arg2[%c0, %c0_0, %c0_1] : memref<1x32x128xf32, #tpu.memory_space<vmem>>, vector<1x32x128xf32>
    %1 = vector.shape_cast %0 : vector<1x32x128xf32> to vector<32x128xf32>
    %c0_2 = arith.constant 0 : index
    %c0_3 = arith.constant 0 : index
    %2 = vector.load %arg3[%c0_2, %c0_3] : memref<32x1xf32, #tpu.memory_space<vmem>>, vector<32x1xf32>
    %3 = vector.broadcast %2 : vector<32x1xf32> to vector<32x128xf32>
    %4 = arith.mulf %1, %3 : vector<32x128xf32>
    %c0_4 = arith.constant 0 : index
    %c0_5 = arith.constant 0 : index
    %5 = vector.load %arg4[%c0_4, %c0_5] : memref<32x1xf32, #tpu.memory_space<vmem>>, vector<32x1xf32>
    %6 = vector.broadcast %5 : vector<32x1xf32> to vector<32x128xf32>
    %7 = arith.addf %4, %6 : vector<32x128xf32>
    %cst = arith.constant 0.000000e+00 : f32
    %8 = vector.broadcast %cst : f32 to vector<32x128xf32>
    %9 = arith.maximumf %7, %8 : vector<32x128xf32>
    %c0_6 = arith.constant 0 : index
    %c0_7 = arith.constant 0 : index
    %c0_8 = arith.constant 0 : index
    %10 = vector.load %arg5[%c0_6, %c0_7, %c0_8] : memref<1x32x128xf32, #tpu.memory_space<vmem>>, vector<1x32x128xf32>
    %11 = vector.shape_cast %10 : vector<1x32x128xf32> to vector<32x128xf32>
    %12 = vector.shape_cast %9 : vector<32x128xf32> to vector<1x32x128xf32>
    tpu.vector_store %arg5[%c0_6, %c0_7, %c0_8], %12 {strides = array<i32>} : memref<1x32x128xf32, #tpu.memory_space<vmem>>, vector<1x32x128xf32>,
    return
  }
  func.func @transform_0(%arg0: i32, %arg1: i32) -> (i32, i32, i32) {
    %c0_i32 = arith.constant 0 : i32
    %c0_i32_0 = arith.constant 0 : i32
    return %arg0, %c0_i32, %arg1 : i32, i32, i32
  }
  func.func @transform_1(%arg0: i32, %arg1: i32) -> (i32, i32) {
    %c0_i32 = arith.constant 0 : i32
    %c0_i32_0 = arith.constant 0 : i32
    %c0_i32_1 = arith.constant 0 : i32
    return %c0_i32, %c0_i32_0 : i32, i32
  }
  func.func @transform_2(%arg0: i32, %arg1: i32) -> (i32, i32) {
    %c0_i32 = arith.constant 0 : i32
    %c0_i32_0 = arith.constant 0 : i32
    %c0_i32_1 = arith.constant 0 : i32
    return %c0_i32, %c0_i32_0 : i32, i32
  }
  func.func @transform_3(%arg0: i32, %arg1: i32) -> (i32, i32, i32) {
    %c0_i32 = arith.constant 0 : i32
    %c0_i32_0 = arith.constant 0 : i32
    return %arg0, %c0_i32, %arg1 : i32, i32, i32
  }
}

</mosaic_0001>

<llo_original>
// kernel: offset_attention.5
$region0: #{offset_attention.5}
  #allocation0 [shape = 'u32[]', space=smem, size = 0x4, offset = 0x4, fixed_abs, tag = 'smem constant byte address 0x4 - core index']
  #allocation1 [shape = 'u32[144,128]{1,0:T(1,128)}', space=vmem, size = 0x12000, scoped, tag = 'internal scratch']
  %s0 = inlined_call_operand.hbm [shape: f32[2,32,128], index: 0, kind: input, shape index: {}, may-alias: {0,3}]
  %s1 = inlined_call_operand.vmem [shape: f32[32,1], index: 1, kind: input, shape index: {}]
  %s2 = inlined_call_operand.vmem [shape: f32[32,1], index: 2, kind: input, shape index: {}]
  %s3 = inlined_call_operand.hbm [shape: f32[2,32,128], index: 3, kind: output, shape index: {}, may-alias: {0,3}]
  %s4 = sld [smem:[#allocation0]]
  $region49: #{offset_attention.5} parent=0
    _
  %s6 = ssub.s32 1, %s4
  %s7 = scalar_select 0, %s6, %s4
  $region1: #{offset_attention.5} parent=0
    #allocation2 [shape = 'u8[32768]{0}', space=vmem, size = 0x8000, scoped, tag = 'input window, operand 0']
    #allocation3 [shape = 's32[2]{0}', space=sflag, size = 0x8, scoped, tag = 'scoped memory for offset_attention.5']
    #allocation4 [shape = 's32[2]{0}', space=sflag, size = 0x8, scoped, tag = 'scoped memory for offset_attention.5']
    #allocation5 [shape = 'u8[32768]{0}', space=vmem, size = 0x8000, scoped, tag = 'output window, operand 0']
    %8 = vsyncpa [#allocation3], 0
    %s9 = scalar_lea.sflag [#allocation3], 1
    %10 = vsyncpa %s9, 0
    %11 = vsyncpa [#allocation4], 0
    %s12 = scalar_lea.sflag [#allocation4], 1
    %13 = vsyncpa %s12, 0
    loop: start=0, step=1, limit=4
    $region2: #{offset_attention.5} parent=1 // loop_pre_header
      _
    $region3: #{offset_attention.5} parent=1 // loop_header
      %s15 = sphi 0, %s19
      %p16 = scmp.ge.s32.totalorder %s15, 4
      %s22 = sphi 0, %s34
      %s23 = sphi 0, %s30
      %s24 = sphi 0, %s22
      %s25 = sphi 0, %s23
      %s26 = sphi 0, %s24
      %s27 = sphi 0, %s25
      %s39 = sphi 0, %s41
      %s42 = sphi 0, %s39
      %s43 = sphi 0, %s42
      %s59 = sphi 0, %s43
      %s63 = sphi 0, %s63
      %s65 = sphi 0, %s63
      %s66 = sphi 0, %s65
      %s80 = sphi 0, %s66
      %s84 = sphi 0, %s84
      %s86 = sphi 0, %s84
      %s87 = sphi 0, %s86
      %s101 = sphi 0, %s87
      %s109 = sphi 0, %s111
      %s112 = sphi 0, %s109
      %s113 = sphi 0, %s112
      %s129 = sphi 0, %s113
    $region4: #{offset_attention.5} parent=1 // loop_header_branch
      %18 = sbr.rel (%p16) target = $region8
    $region5: #{offset_attention.5} parent=1 // loop_body
      %s20 = ssub.s32 %s15, 1
      %s21 = ssub.s32 %s15, 2
      %s28 = sadd.s32 1, %s23
      %p29 = scmp.ge.s32.totalorder %s28, 1
      %s30 = scalar_select %p29, 0, %s28
      %s31 = sadd.s32 1, %s22
      %s32 = scalar_select %p29, %s31, %s22
      %p33 = scmp.ge.s32.totalorder %s32, 2
      %s34 = scalar_select %p33, 0, %s32
      %s35 = ssub.s32 %s22, %s34
      %s36 = ssub.s32 %s23, %s30
      %s37 = sor.u32 %s35, %s36
      %p38 = scmp.eq.s32.totalorder %s37, 0
      %s40 = sadd.s32 %s39, 1
      %s41 = scalar_select %p38, %s39, %s40
      %p44 = pneg %p38
      %p45 = scmp.eq.s32.totalorder %s15, 1
      %p46 = por %p44, %p45
      %p47 = scmp.ne.s32.totalorder %s39, %s42
      %p48 = scmp.eq.s32.totalorder %s15, 0
      %p49 = por %p47, %p48
      %p50 = scmp.ne.s32.totalorder %s39, %s42
      %p51 = scmp.eq.s32.totalorder %s20, 1
      %p52 = por %p50, %p51
      %p53 = scmp.ne.s32.totalorder %s42, %s43
      %p54 = scmp.eq.s32.totalorder %s20, 0
      %p55 = por %p53, %p54
      %p56 = scmp.ne.s32.totalorder %s42, %s43
      %p57 = scmp.eq.s32.totalorder %s21, 1
      %p58 = por %p56, %p57
      %p60 = scmp.ne.s32.totalorder %s43, %s59
      %p61 = scmp.eq.s32.totalorder %s21, 0
      %p62 = por %p60, %p61
      %s64 = sadd.s32 %s63, 1
      %p67 = scmp.eq.s32.totalorder %s15, 1
      %p68 = scmp.ne.s32.totalorder %s63, %s65
      %p69 = scmp.eq.s32.totalorder %s15, 0
      %p70 = por %p68, %p69
      %p71 = scmp.ne.s32.totalorder %s63, %s65
      %p72 = scmp.eq.s32.totalorder %s20, 1
      %p73 = por %p71, %p72
      %p74 = scmp.ne.s32.totalorder %s65, %s66
      %p75 = scmp.eq.s32.totalorder %s20, 0
      %p76 = por %p74, %p75
      %p77 = scmp.ne.s32.totalorder %s65, %s66
      %p78 = scmp.eq.s32.totalorder %s21, 1
      %p79 = por %p77, %p78
      %p81 = scmp.ne.s32.totalorder %s66, %s80
      %p82 = scmp.eq.s32.totalorder %s21, 0
      %p83 = por %p81, %p82
      %s85 = sadd.s32 %s84, 1
      %p88 = scmp.eq.s32.totalorder %s15, 1
      %p89 = scmp.ne.s32.totalorder %s84, %s86
      %p90 = scmp.eq.s32.totalorder %s15, 0
      %p91 = por %p89, %p90
      %p92 = scmp.ne.s32.totalorder %s84, %s86
      %p93 = scmp.eq.s32.totalorder %s20, 1
      %p94 = por %p92, %p93
      %p95 = scmp.ne.s32.totalorder %s86, %s87
      %p96 = scmp.eq.s32.totalorder %s20, 0
      %p97 = por %p95, %p96
      %p98 = scmp.ne.s32.totalorder %s86, %s87
      %p99 = scmp.eq.s32.totalorder %s21, 1
      %p100 = por %p98, %p99
      %p102 = scmp.ne.s32.totalorder %s87, %s101
      %p103 = scmp.eq.s32.totalorder %s21, 0
      %p104 = por %p102, %p103
      %s105 = ssub.s32 %s22, %s34
      %s106 = ssub.s32 %s23, %s30
      %s107 = sor.u32 %s105, %s106
      %p108 = scmp.eq.s32.totalorder %s107, 0
      %s110 = sadd.s32 %s109, 1
      %s111 = scalar_select %p108, %s109, %s110
      %p114 = pneg %p108
      %p115 = scmp.eq.s32.totalorder %s15, 1
      %p116 = por %p114, %p115
      %p117 = scmp.ne.s32.totalorder %s109, %s112
      %p118 = scmp.eq.s32.totalorder %s15, 0
      %p119 = por %p117, %p118
      %p120 = scmp.ne.s32.totalorder %s109, %s112
      %p121 = scmp.eq.s32.totalorder %s20, 1
      %p122 = por %p120, %p121
      %p123 = scmp.ne.s32.totalorder %s112, %s113
      %p124 = scmp.eq.s32.totalorder %s20, 0
      %p125 = por %p123, %p124
      %p126 = scmp.ne.s32.totalorder %s112, %s113
      %p127 = scmp.eq.s32.totalorder %s21, 1
      %p128 = por %p126, %p127
      %p130 = scmp.ne.s32.totalorder %s113, %s129
      %p131 = scmp.eq.s32.totalorder %s21, 0
      %p132 = por %p130, %p131
      %p133 = scmp.le.s32.totalorder 1, %s15
      %p134 = scmp.lt.s32.totalorder %s15, 3
      %p135 = pnand %p133, %p134
      %p136 = pneg %p135
      // Predicated region
      $region9: #{offset_attention.5} parent=5 // pred_check
        _
      $region10: #{offset_attention.5} parent=5 // pred_check_branch
        %138 = sbr.rel (%p135) target = $region12
      $region11: #{offset_attention.5} parent=5 // pred_region
        %s139 = ssub.s32 %s15, 1
        // Predicated region
        $region13: #{offset_attention.5} parent=11 // pred_check
          %p140 = pneg %p76
        $region14: #{offset_attention.5} parent=11 // pred_check_branch
          %142 = sbr.rel (%p140) target = $region16
        $region15: #{offset_attention.5} parent=11 // pred_region
          _
        $region16: #{offset_attention.5} parent=11 // pred_fallthru
          _
        // Predicated region
        $region17: #{offset_attention.5} parent=11 // pred_check
          %p143 = pneg %p97
        $region18: #{offset_attention.5} parent=11 // pred_check_branch
          %145 = sbr.rel (%p143) target = $region20
        $region19: #{offset_attention.5} parent=11 // pred_region
          _
        $region20: #{offset_attention.5} parent=11 // pred_fallthru
          _
      $region12: #{offset_attention.5} parent=5 // pred_fallthru
        _
      %p146 = scmp.lt.s32.totalorder %s15, 2
      // Predicated region
      $region21: #{offset_attention.5} parent=5 // pred_check
        %p147 = pneg %p146
      $region22: #{offset_attention.5} parent=5 // pred_check_branch
        %149 = sbr.rel (%p147) target = $region24
      $region23: #{offset_attention.5} parent=5 // pred_region
        // Predicated region
        $region25: #{offset_attention.5} parent=23 // pred_check
          %p150 = pneg %p49
        $region26: #{offset_attention.5} parent=23 // pred_check_branch
          %152 = sbr.rel (%p150) target = $region28
        $region27: #{offset_attention.5} parent=23 // pred_region
          %s153 = sand.u32 %s39, 1
          %s154 = scalar_lea.sflag [#allocation3], %s153
          %s155 = sand.u32 %s39, 1
          %s156 = smul.addr %s155, 32
          %s157 = scalar_lea.vmem [#allocation2], %s156
          %s159 = ssub.s32 512, 512
          %160 = vsyncadd %s154, %s159
          %s161 = smul.addr %s22, 4
          %s162 = sadd.s32 %s23, %s161
          %s163 = smul.addr %s162, 128
          %s164 = scalar_lea.hbm %s0, %s163
          %s165 = sshll.u32 %s157, 4
          %s166 = int_to_ptr.vmem [resolvable:$true] %s165
          %171 = dma.hbm_to_vmem [thread:$0]  %s164, 512, %s166, %s154, 128, 128, 8
        $region28: #{offset_attention.5} parent=23 // pred_fallthru
          _
      $region24: #{offset_attention.5} parent=5 // pred_fallthru
        _
      %p172 = scmp.le.s32.totalorder 1, %s15
      %p173 = scmp.lt.s32.totalorder %s15, 3
      %p174 = pnand %p172, %p173
      %p175 = pneg %p174
      // Predicated region
      $region29: #{offset_attention.5} parent=5 // pred_check
        _
      $region30: #{offset_attention.5} parent=5 // pred_check_branch
        %177 = sbr.rel (%p174) target = $region32
      $region31: #{offset_attention.5} parent=5 // pred_region
        %s178 = ssub.s32 %s15, 1
        %s179 = sand.u32 %s42, 1
        %s180 = scalar_lea.sflag [#allocation3], %s179
        %s181 = sand.u32 %s42, 1
        %s182 = smul.addr %s181, 32
        %s183 = scalar_lea.vmem [#allocation2], %s182
        // Predicated region
        $region33: #{offset_attention.5} parent=31 // pred_check
          %p184 = pneg %p55
        $region34: #{offset_attention.5} parent=31 // pred_check_branch
          %186 = sbr.rel (%p184) target = $region36
        $region35: #{offset_attention.5} parent=31 // pred_region
          %187 = dma.done %s180, 512
        $region36: #{offset_attention.5} parent=31 // pred_fallthru
          _
        %s188 = sand.u32 %s42, 1
        %s189 = scalar_lea.sflag [#allocation3], %s188
        %s190 = sand.u32 %s42, 1
        %s191 = smul.addr %s190, 32
        %s192 = scalar_lea.vmem [#allocation2], %s191
        %p193 = pneg %p55
        %p194 = pneg %p52
        %p195 = pneg %p76
        %p196 = pneg %p73
        %p197 = pneg %p97
        %p198 = pneg %p94
        %p199 = pneg %p125
        %p200 = pneg %p122
        %s201 = sand.u32 %s112, 1
        %s202 = scalar_lea.sflag [#allocation4], %s201
        %s203 = sand.u32 %s112, 1
        %s204 = smul.addr %s203, 32
        %s205 = scalar_lea.vmem [#allocation5], %s204
        %v206 = vld [vmem:[%s183] sm:$0xff]
        %v207 = vld [vmem:[%s183 + $0x8] sm:$0xff]
        %v208 = vld [vmem:[%s183 + $0x10] sm:$0xff]
        %v209 = vld [vmem:[%s183 + $0x18] sm:$0xff]
        %v210 = vld [vmem:[%s1] sm:$0xff]
        %v211 = vld [vmem:[%s1 + $0x8] sm:$0xff]
        %v212 = vld [vmem:[%s1 + $0x10] sm:$0xff]
        %v213 = vld [vmem:[%s1 + $0x18] sm:$0xff]
        %215 = vset.pattern.permute.xlu0 0
        %216 = vperm.xlu0 %215, %v210
        %v217 = vpop.permute.xlu0 %216
        %220 = vset.pattern.permute.xlu0 0
        %221 = vperm.xlu0 %220, %v211
        %v222 = vpop.permute.xlu0 %221
        %225 = vset.pattern.permute.xlu0 0
        %226 = vperm.xlu0 %225, %v212
        %v227 = vpop.permute.xlu0 %226
        %230 = vset.pattern.permute.xlu0 0
        %231 = vperm.xlu0 %230, %v213
        %v232 = vpop.permute.xlu0 %231
        %v234 = vmul.f32 %v206, %v217
        %v235 = vmul.f32 %v207, %v222
        %v236 = vmul.f32 %v208, %v227
        %v237 = vmul.f32 %v209, %v232
        %v238 = vld [vmem:[%s2] sm:$0xff]
        %v239 = vld [vmem:[%s2 + $0x8] sm:$0xff]
        %v240 = vld [vmem:[%s2 + $0x10] sm:$0xff]
        %v241 = vld [vmem:[%s2 + $0x18] sm:$0xff]
        %243 = vset.pattern.permute.xlu0 0
        %244 = vperm.xlu0 %243, %v238
        %v245 = vpop.permute.xlu0 %244
        %248 = vset.pattern.permute.xlu0 0
        %249 = vperm.xlu0 %248, %v239
        %v250 = vpop.permute.xlu0 %249
        %253 = vset.pattern.permute.xlu0 0
        %254 = vperm.xlu0 %253, %v240
        %v255 = vpop.permute.xlu0 %254
        %258 = vset.pattern.permute.xlu0 0
        %259 = vperm.xlu0 %258, %v241
        %v260 = vpop.permute.xlu0 %259
        %v262 = vadd.f32 %v234, %v245
        %v263 = vadd.f32 %v235, %v250
        %v264 = vadd.f32 %v236, %v255
        %v265 = vadd.f32 %v237, %v260
        %v266 = vmax.f32 %v262, 0.0
        %v267 = vmax.f32 %v263, 0.0
        %v268 = vmax.f32 %v264, 0.0
        %v269 = vmax.f32 %v265, 0.0
        %270 = vst [vmem:[%s205] sm:$0xff] %v266
        %271 = vst [vmem:[%s205 + $0x8] sm:$0xff] %v267
        %272 = vst [vmem:[%s205 + $0x10] sm:$0xff] %v268
        %273 = vst [vmem:[%s205 + $0x18] sm:$0xff] %v269
        %s274 = sand.u32 %s112, 1
        %s275 = scalar_lea.sflag [#allocation4], %s274
        %s276 = sand.u32 %s112, 1
        %s277 = smul.addr %s276, 32
        %s278 = scalar_lea.vmem [#allocation5], %s277
        // Predicated region
        $region37: #{offset_attention.5} parent=31 // pred_check
          %p279 = pneg %p122
        $region38: #{offset_attention.5} parent=31 // pred_check_branch
          %281 = sbr.rel (%p279) target = $region40
        $region39: #{offset_attention.5} parent=31 // pred_region
          %s283 = ssub.s32 512, 512
          %284 = vsyncadd %s275, %s283
          %s285 = smul.addr %s24, 4
          %s286 = sadd.s32 %s25, %s285
          %s287 = smul.addr %s286, 128
          %s288 = scalar_lea.hbm %s3, %s287
          %s289 = sshll.u32 %s278, 4
          %s290 = int_to_ptr.vmem [resolvable:$true] %s289
          %295 = dma.vmem_to_hbm [thread:$0]  %s290, 512, %s288, %s275, 128, 128, 8
        $region40: #{offset_attention.5} parent=31 // pred_fallthru
          _
      $region32: #{offset_attention.5} parent=5 // pred_fallthru
        _
      %p296 = scmp.le.s32.totalorder 2, %s15
      // Predicated region
      $region41: #{offset_attention.5} parent=5 // pred_check
        %p297 = pneg %p296
      $region42: #{offset_attention.5} parent=5 // pred_check_branch
        %299 = sbr.rel (%p297) target = $region44
      $region43: #{offset_attention.5} parent=5 // pred_region
        %s300 = ssub.s32 %s15, 2
        // Predicated region
        $region45: #{offset_attention.5} parent=43 // pred_check
          %p301 = pneg %p128
        $region46: #{offset_attention.5} parent=43 // pred_check_branch
          %303 = sbr.rel (%p301) target = $region48
        $region47: #{offset_attention.5} parent=43 // pred_region
          %s304 = sand.u32 %s113, 1
          %s305 = scalar_lea.sflag [#allocation4], %s304
          %s306 = sand.u32 %s113, 1
          %s307 = smul.addr %s306, 32
          %s308 = scalar_lea.vmem [#allocation5], %s307
          %309 = dma.done %s305, 512
        $region48: #{offset_attention.5} parent=43 // pred_fallthru
          _
      $region44: #{offset_attention.5} parent=5 // pred_fallthru
        _
    $region6: #{offset_attention.5} parent=1 // loop_footer
      %s19 = sadd.s32 1, %s15
    $region7: #{offset_attention.5} parent=1 // loop_footer_branch
      %14 = sbr.rel target = $region3
    $region8: #{offset_attention.5} parent=1 // loop_exit
      _
    %310 = vsyncpa [#allocation3], 1
    %s311 = scalar_lea.sflag [#allocation3], 1
    %312 = vsyncpa %s311, 1
    %313 = vsyncpa [#allocation4], 1
    %s314 = scalar_lea.sflag [#allocation4], 1
    %315 = vsyncpa %s314, 1

// kernel: offset_attention.4
$region0: #{offset_attention.4}
  #allocation0 [shape = 'u32[]', space=smem, size = 0x4, offset = 0x4, fixed_abs, tag = 'smem constant byte address 0x4 - core index']
  #allocation1 [shape = 'u32[144,128]{1,0:T(1,128)}', space=vmem, size = 0x12000, scoped, tag = 'internal scratch']
  %s0 = inlined_call_operand.vmem [shape: f32[2,32,128], index: 0, kind: input, shape index: {}]
  %s1 = inlined_call_operand.vmem [shape: bf16[2,32,128], index: 1, kind: input, shape index: {}]
  %s2 = inlined_call_operand.vmem [shape: bf16[2,65,128], index: 2, kind: input, shape index: {}]
  %s3 = inlined_call_operand.hbm [shape: f32[2,32,128], index: 3, kind: output, shape index: {0}]
  %s4 = inlined_call_operand.vmem [shape: f32[2,1,32,2], index: 4, kind: output, shape index: {1}]
  %5 = xla_tuple %s3, %s4
  %s6 = sld [smem:[#allocation0]]
  $region53: #{offset_attention.4} parent=0
    _
  %s8 = ssub.s32 1, %s6
  %s9 = scalar_select 0, %s8, %s6
  $region1: #{offset_attention.4} parent=0
    #allocation2 [shape = 'u8[32768]{0}', space=vmem, size = 0x8000, scoped, tag = 'output window, operand 0']
    #allocation3 [shape = 's32[2]{0}', space=sflag, size = 0x8, scoped, tag = 'scoped memory for offset_attention.4']
    %10 = vsyncpa [#allocation3], 0
    %s11 = scalar_lea.sflag [#allocation3], 1
    %12 = vsyncpa %s11, 0
    loop: start=0, step=1, limit=4
    $region2: #{offset_attention.4} parent=1 // loop_pre_header
      _
    $region3: #{offset_attention.4} parent=1 // loop_header
      %s14 = sphi 0, %s18
      %p15 = scmp.ge.s32.totalorder %s14, 4
      %s21 = sphi 0, %s33
      %s22 = sphi 0, %s29
      %s23 = sphi 0, %s21
      %s24 = sphi 0, %s22
      %s25 = sphi 0, %s23
      %s26 = sphi 0, %s24
      %s38 = sphi 0, %s40
      %s41 = sphi 0, %s38
      %s42 = sphi 0, %s41
      %s58 = sphi 0, %s42
      %s66 = sphi 0, %s68
      %s69 = sphi 0, %s66
      %s70 = sphi 0, %s69
      %s86 = sphi 0, %s70
      %s92 = sphi 0, %s94
      %s95 = sphi 0, %s92
      %s96 = sphi 0, %s95
      %s112 = sphi 0, %s96
      %s120 = sphi 0, %s122
      %s123 = sphi 0, %s120
      %s124 = sphi 0, %s123
      %s140 = sphi 0, %s124
      %s148 = sphi 0, %s150
      %s151 = sphi 0, %s148
      %s152 = sphi 0, %s151
      %s168 = sphi 0, %s152
    $region4: #{offset_attention.4} parent=1 // loop_header_branch
      %17 = sbr.rel (%p15) target = $region8
    $region5: #{offset_attention.4} parent=1 // loop_body
      %s19 = ssub.s32 %s14, 1
      %s20 = ssub.s32 %s14, 2
      %s27 = sadd.s32 1, %s22
      %p28 = scmp.ge.s32.totalorder %s27, 1
      %s29 = scalar_select %p28, 0, %s27
      %s30 = sadd.s32 1, %s21
      %s31 = scalar_select %p28, %s30, %s21
      %p32 = scmp.ge.s32.totalorder %s31, 2
      %s33 = scalar_select %p32, 0, %s31
      %s34 = ssub.s32 %s21, %s33
      %s35 = ssub.s32 %s22, %s29
      %s36 = sor.u32 %s34, %s35
      %p37 = scmp.eq.s32.totalorder %s36, 0
      %s39 = sadd.s32 %s38, 1
      %s40 = scalar_select %p37, %s38, %s39
      %p43 = pneg %p37
      %p44 = scmp.eq.s32.totalorder %s14, 1
      %p45 = por %p43, %p44
      %p46 = scmp.ne.s32.totalorder %s38, %s41
      %p47 = scmp.eq.s32.totalorder %s14, 0
      %p48 = por %p46, %p47
      %p49 = scmp.ne.s32.totalorder %s38, %s41
      %p50 = scmp.eq.s32.totalorder %s19, 1
      %p51 = por %p49, %p50
      %p52 = scmp.ne.s32.totalorder %s41, %s42
      %p53 = scmp.eq.s32.totalorder %s19, 0
      %p54 = por %p52, %p53
      %p55 = scmp.ne.s32.totalorder %s41, %s42
      %p56 = scmp.eq.s32.totalorder %s20, 1
      %p57 = por %p55, %p56
      %p59 = scmp.ne.s32.totalorder %s42, %s58
      %p60 = scmp.eq.s32.totalorder %s20, 0
      %p61 = por %p59, %p60
      %s62 = ssub.s32 %s21, %s33
      %s63 = ssub.s32 %s22, %s29
      %s64 = sor.u32 %s62, %s63
      %p65 = scmp.eq.s32.totalorder %s64, 0
      %s67 = sadd.s32 %s66, 1
      %s68 = scalar_select %p65, %s66, %s67
      %p71 = pneg %p65
      %p72 = scmp.eq.s32.totalorder %s14, 1
      %p73 = por %p71, %p72
      %p74 = scmp.ne.s32.totalorder %s66, %s69
      %p75 = scmp.eq.s32.totalorder %s14, 0
      %p76 = por %p74, %p75
      %p77 = scmp.ne.s32.totalorder %s66, %s69
      %p78 = scmp.eq.s32.totalorder %s19, 1
      %p79 = por %p77, %p78
      %p80 = scmp.ne.s32.totalorder %s69, %s70
      %p81 = scmp.eq.s32.totalorder %s19, 0
      %p82 = por %p80, %p81
      %p83 = scmp.ne.s32.totalorder %s69, %s70
      %p84 = scmp.eq.s32.totalorder %s20, 1
      %p85 = por %p83, %p84
      %p87 = scmp.ne.s32.totalorder %s70, %s86
      %p88 = scmp.eq.s32.totalorder %s20, 0
      %p89 = por %p87, %p88
      %s90 = ssub.s32 %s21, %s33
      %p91 = scmp.eq.s32.totalorder %s90, 0
      %s93 = sadd.s32 %s92, 1
      %s94 = scalar_select %p91, %s92, %s93
      %p97 = pneg %p91
      %p98 = scmp.eq.s32.totalorder %s14, 1
      %p99 = por %p97, %p98
      %p100 = scmp.ne.s32.totalorder %s92, %s95
      %p101 = scmp.eq.s32.totalorder %s14, 0
      %p102 = por %p100, %p101
      %p103 = scmp.ne.s32.totalorder %s92, %s95
      %p104 = scmp.eq.s32.totalorder %s19, 1
      %p105 = por %p103, %p104
      %p106 = scmp.ne.s32.totalorder %s95, %s96
      %p107 = scmp.eq.s32.totalorder %s19, 0
      %p108 = por %p106, %p107
      %p109 = scmp.ne.s32.totalorder %s95, %s96
      %p110 = scmp.eq.s32.totalorder %s20, 1
      %p111 = por %p109, %p110
      %p113 = scmp.ne.s32.totalorder %s96, %s112
      %p114 = scmp.eq.s32.totalorder %s20, 0
      %p115 = por %p113, %p114
      %s116 = ssub.s32 %s21, %s33
      %s117 = ssub.s32 %s22, %s29
      %s118 = sor.u32 %s116, %s117
      %p119 = scmp.eq.s32.totalorder %s118, 0
      %s121 = sadd.s32 %s120, 1
      %s122 = scalar_select %p119, %s120, %s121
      %p125 = pneg %p119
      %p126 = scmp.eq.s32.totalorder %s14, 1
      %p127 = por %p125, %p126
      %p128 = scmp.ne.s32.totalorder %s120, %s123
      %p129 = scmp.eq.s32.totalorder %s14, 0
      %p130 = por %p128, %p129
      %p131 = scmp.ne.s32.totalorder %s120, %s123
      %p132 = scmp.eq.s32.totalorder %s19, 1
      %p133 = por %p131, %p132
      %p134 = scmp.ne.s32.totalorder %s123, %s124
      %p135 = scmp.eq.s32.totalorder %s19, 0
      %p136 = por %p134, %p135
      %p137 = scmp.ne.s32.totalorder %s123, %s124
      %p138 = scmp.eq.s32.totalorder %s20, 1
      %p139 = por %p137, %p138
      %p141 = scmp.ne.s32.totalorder %s124, %s140
      %p142 = scmp.eq.s32.totalorder %s20, 0
      %p143 = por %p141, %p142
      %s144 = ssub.s32 %s21, %s33
      %s145 = ssub.s32 %s22, %s29
      %s146 = sor.u32 %s144, %s145
      %p147 = scmp.eq.s32.totalorder %s146, 0
      %s149 = sadd.s32 %s148, 1
      %s150 = scalar_select %p147, %s148, %s149
      %p153 = pneg %p147
      %p154 = scmp.eq.s32.totalorder %s14, 1
      %p155 = por %p153, %p154
      %p156 = scmp.ne.s32.totalorder %s148, %s151
      %p157 = scmp.eq.s32.totalorder %s14, 0
      %p158 = por %p156, %p157
      %p159 = scmp.ne.s32.totalorder %s148, %s151
      %p160 = scmp.eq.s32.totalorder %s19, 1
      %p161 = por %p159, %p160
      %p162 = scmp.ne.s32.totalorder %s151, %s152
      %p163 = scmp.eq.s32.totalorder %s19, 0
      %p164 = por %p162, %p163
      %p165 = scmp.ne.s32.totalorder %s151, %s152
      %p166 = scmp.eq.s32.totalorder %s20, 1
      %p167 = por %p165, %p166
      %p169 = scmp.ne.s32.totalorder %s152, %s168
      %p170 = scmp.eq.s32.totalorder %s20, 0
      %p171 = por %p169, %p170
      %p172 = scmp.le.s32.totalorder 1, %s14
      %p173 = scmp.lt.s32.totalorder %s14, 3
      %p174 = pnand %p172, %p173
      %p175 = pneg %p174
      // Predicated region
      $region9: #{offset_attention.4} parent=5 // pred_check
        _
      $region10: #{offset_attention.4} parent=5 // pred_check_branch
        %177 = sbr.rel (%p174) target = $region12
      $region11: #{offset_attention.4} parent=5 // pred_region
        %s178 = ssub.s32 %s14, 1
      $region12: #{offset_attention.4} parent=5 // pred_fallthru
        _
      %p179 = scmp.lt.s32.totalorder %s14, 2
      // Predicated region
      $region13: #{offset_attention.4} parent=5 // pred_check
        %p180 = pneg %p179
      $region14: #{offset_attention.4} parent=5 // pred_check_branch
        %182 = sbr.rel (%p180) target = $region16
      $region15: #{offset_attention.4} parent=5 // pred_region
        // Predicated region
        $region17: #{offset_attention.4} parent=15 // pred_check
          %p183 = pneg %p48
        $region18: #{offset_attention.4} parent=15 // pred_check_branch
          %185 = sbr.rel (%p183) target = $region20
        $region19: #{offset_attention.4} parent=15 // pred_region
          %p186 = scmp.lt.s32.totalorder %s21, 1
          %s187 = scalar_select %p186, %s21, 1
          %p188 = scmp.lt.s32.totalorder %s22, 0
          %s189 = scalar_select %p188, %s22, 0
          %s190 = smul.addr %s187, 4
          %s191 = sadd.s32 %s189, %s190
          %s192 = smul.addr %s191, 8
          %s193 = scalar_lea.vmem %s0, %s192
        $region20: #{offset_attention.4} parent=15 // pred_fallthru
          _
        // Predicated region
        $region21: #{offset_attention.4} parent=15 // pred_check
          %p194 = pneg %p76
        $region22: #{offset_attention.4} parent=15 // pred_check_branch
          %196 = sbr.rel (%p194) target = $region24
        $region23: #{offset_attention.4} parent=15 // pred_region
          %p197 = scmp.lt.s32.totalorder %s21, 1
          %s198 = scalar_select %p197, %s21, 1
          %p199 = scmp.lt.s32.totalorder %s22, 0
          %s200 = scalar_select %p199, %s22, 0
          %s201 = smul.addr %s198, 4
          %s202 = sadd.s32 %s200, %s201
          %s203 = smul.addr %s202, 4
          %s204 = scalar_lea.vmem %s1, %s203
        $region24: #{offset_attention.4} parent=15 // pred_fallthru
          _
        // Predicated region
        $region25: #{offset_attention.4} parent=15 // pred_check
          %p205 = pneg %p102
        $region26: #{offset_attention.4} parent=15 // pred_check_branch
          %207 = sbr.rel (%p205) target = $region28
        $region27: #{offset_attention.4} parent=15 // pred_region
          %p208 = scmp.lt.s32.totalorder %s21, 1
          %s209 = scalar_select %p208, %s21, 1
          %s210 = smul.addr %s209, 9
          %s211 = smul.addr %s210, 4
          %s212 = scalar_lea.vmem %s2, %s211
        $region28: #{offset_attention.4} parent=15 // pred_fallthru
          _
      $region16: #{offset_attention.4} parent=5 // pred_fallthru
        _
      %p213 = scmp.le.s32.totalorder 1, %s14
      %p214 = scmp.lt.s32.totalorder %s14, 3
      %p215 = pnand %p213, %p214
      %p216 = pneg %p215
      // Predicated region
      $region29: #{offset_attention.4} parent=5 // pred_check
        _
      $region30: #{offset_attention.4} parent=5 // pred_check_branch
        %218 = sbr.rel (%p215) target = $region32
      $region31: #{offset_attention.4} parent=5 // pred_region
        %s219 = ssub.s32 %s14, 1
        %p220 = scmp.lt.s32.totalorder %s23, 1
        %s221 = scalar_select %p220, %s23, 1
        %p222 = scmp.lt.s32.totalorder %s24, 0
        %s223 = scalar_select %p222, %s24, 0
        %s224 = smul.addr %s221, 4
        %s225 = sadd.s32 %s223, %s224
        %s226 = smul.addr %s225, 8
        %s227 = scalar_lea.vmem %s0, %s226
        %p228 = pneg %p54
        %p229 = pneg %p51
        %p230 = scmp.lt.s32.totalorder %s23, 1
        %s231 = scalar_select %p230, %s23, 1
        %p232 = scmp.lt.s32.totalorder %s24, 0
        %s233 = scalar_select %p232, %s24, 0
        %s234 = smul.addr %s231, 4
        %s235 = sadd.s32 %s233, %s234
        %s236 = smul.addr %s235, 4
        %s237 = scalar_lea.vmem %s1, %s236
        %p238 = pneg %p82
        %p239 = pneg %p79
        %p240 = scmp.lt.s32.totalorder %s23, 1
        %s241 = scalar_select %p240, %s23, 1
        %s242 = smul.addr %s241, 9
        %s243 = smul.addr %s242, 4
        %s244 = scalar_lea.vmem %s2, %s243
        %p245 = pneg %p108
        %p246 = pneg %p105
        %p247 = pneg %p136
        %p248 = pneg %p133
        %s249 = sand.u32 %s123, 1
        %s250 = scalar_lea.sflag [#allocation3], %s249
        %s251 = sand.u32 %s123, 1
        %s252 = smul.addr %s251, 32
        %s253 = scalar_lea.vmem [#allocation2], %s252
        %p254 = pneg %p164
        %p255 = pneg %p161
        %p256 = scmp.lt.s32.totalorder %s23, 1
        %s257 = scalar_select %p256, %s23, 1
        %p258 = scmp.lt.s32.totalorder %s24, 0
        %s259 = scalar_select %p258, %s24, 0
        %s260 = smul.addr %s259, 4
        %s261 = smul.addr %s257, 4
        %s262 = sadd.s32 %s260, %s261
        %s263 = smul.addr %s262, 8
        %s264 = scalar_lea.vmem %s4, %s263
        %p265 = scmp.lt.s32.totalorder %s23, 1
        %s266 = scalar_select %p265, %s23, 1
        %p267 = scmp.lt.s32.totalorder %s24, 0
        %s268 = scalar_select %p267, %s24, 0
        %s269 = smul.addr %s266, 4
        %s270 = sadd.s32 %s268, %s269
        %s271 = smul.addr %s270, 8
        %s272 = scalar_lea.vmem %s0, %s271
        %p273 = scmp.lt.s32.totalorder %s23, 1
        %s274 = scalar_select %p273, %s23, 1
        %p275 = scmp.lt.s32.totalorder %s24, 0
        %s276 = scalar_select %p275, %s24, 0
        %s277 = smul.addr %s274, 4
        %s278 = sadd.s32 %s276, %s277
        %s279 = smul.addr %s278, 4
        %s280 = scalar_lea.vmem %s1, %s279
        %p281 = scmp.lt.s32.totalorder %s23, 1
        %s282 = scalar_select %p281, %s23, 1
        %s283 = smul.addr %s282, 9
        %s284 = smul.addr %s283, 4
        %s285 = scalar_lea.vmem %s2, %s284
        %p286 = scmp.lt.s32.totalorder %s23, 1
        %s287 = scalar_select %p286, %s23, 1
        %p288 = scmp.lt.s32.totalorder %s24, 0
        %s289 = scalar_select %p288, %s24, 0
        %s290 = smul.addr %s289, 4
        %s291 = smul.addr %s287, 4
        %s292 = sadd.s32 %s290, %s291
        %s293 = smul.addr %s292, 8
        %s294 = scalar_lea.vmem %s4, %s293
        %v296 = vld [vmem:[%s280] sm:$0xf]
        %v297 = vld [vmem:[%s280 + $0x4] sm:$0xf]
        %v298 = vld [vmem:[%s280 + $0x8] sm:$0xf]
        %v299 = vld [vmem:[%s280 + $0xc] sm:$0xf]
        %v300 = vld [vmem:[%s285] sm:$0xf]
        %v301 = vld [vmem:[%s285 + $0x4] sm:$0xf]
        %v302 = vld [vmem:[%s285 + $0x8] sm:$0xf]
        %v303 = vld [vmem:[%s285 + $0xc] sm:$0xf]
        %v304 = vld [vmem:[%s285 + $0x10] sm:$0xf]
        %v305 = vld [vmem:[%s285 + $0x14] sm:$0xf]
        %v306 = vld [vmem:[%s285 + $0x18] sm:$0xf]
        %v307 = vld [vmem:[%s285 + $0x1c] sm:$0xf]
        %v308 = vld [vmem:[%s285 + $0x20] sm:$0x1]
        %v313 = vunpack.c.l.b16 %v300
        %v314 = vunpack.c.l.b16 %v301
        %v315 = vunpack.c.l.b16 %v302
        %v316 = vunpack.c.l.b16 %v303
        %v317 = vpack.c.b16 %v314, %v313
        %v318 = vpack.c.b16 %v316, %v315
        %321 = vxpose.xlu0.c.b16.start [1/8] %v317, 128
        %322 = vxpose.xlu0.c.b16.cont [2/8] %v318, 128
        %323 = vxpose.xlu0.c.b16.cont [3/8] 0, 128
        %324 = vxpose.xlu0.c.b16.cont [4/8] 0, 128
        %325 = vxpose.xlu0.c.b16.cont [5/8] 0, 128
        %326 = vxpose.xlu0.c.b16.cont [6/8] 0, 128
        %327 = vxpose.xlu0.c.b16.cont [7/8] 0, 128
        %328 = vxpose.xlu0.c.b16.end [8/8] 0, 128
        %v329 = vpop.trf.xlu0
        %v330 = vpop.trf.xlu0
        %v331 = vpop.trf.xlu0
        %v332 = vpop.trf.xlu0
        %v333 = vpop.trf.xlu0
        %v334 = vpop.trf.xlu0
        %v335 = vpop.trf.xlu0
        %v336 = vpop.trf.xlu0
        %v341 = vunpack.c.l.b16 %v296
        %v342 = vunpack.c.l.b16 %v297
        %v343 = vunpack.c.l.b16 %v298
        %v344 = vunpack.c.l.b16 %v299
        %v345 = vpack.c.b16 %v342, %v341
        %v346 = vpack.c.b16 %v344, %v343
        %vm349 = vcmask 261120
        %v351 = vsel %vm349, %v329, 0
        %v354 = vsel %vm349, %v330, 0
        %v357 = vsel %vm349, %v331, 0
        %v360 = vsel %vm349, %v332, 0
        %v363 = vsel %vm349, %v333, 0
        %v366 = vsel %vm349, %v334, 0
        %v369 = vsel %vm349, %v335, 0
        %v372 = vsel %vm349, %v336, 0
        %374 = vmatprep.subr.bf16.mxu0 0
        %375 = vmatpush1.bf16.msra.mxu0 %v345
        %376 = vmatprep.subr.bf16.mxu0 0
        %377 = vmatpush1.bf16.msra.mxu0 %v346
        %378 = vmatprep.subr.bf16.mxu0 0
        %379 = vmatpush1.bf16.msra.mxu0 0
        %380 = vmatprep.subr.bf16.mxu0 0
        %381 = vmatpush1.bf16.msra.mxu0 0
        %382 = vmatprep.subr.bf16.mxu0 0
        %383 = vmatpush1.bf16.msra.mxu0 0
        %384 = vmatprep.subr.bf16.mxu0 0
        %385 = vmatpush1.bf16.msra.mxu0 0
        %386 = vmatprep.subr.bf16.mxu0 0
        %387 = vmatpush1.bf16.msra.mxu0 0
        %388 = vmatprep.subr.bf16.mxu0 0
        %389 = vmatpush1.bf16.msra.mxu0 0
        %390 = vmatprep.subr.bf16.mxu0 0
        %391 = vmatpush1.bf16.msra.mxu0 0
        %392 = vmatprep.subr.bf16.mxu0 0
        %393 = vmatpush1.bf16.msra.mxu0 0
        %394 = vmatprep.subr.bf16.mxu0 0
        %395 = vmatpush1.bf16.msra.mxu0 0
        %396 = vmatprep.subr.bf16.mxu0 0
        %397 = vmatpush1.bf16.msra.mxu0 0
        %398 = vmatprep.subr.bf16.mxu0 0
        %399 = vmatpush1.bf16.msra.mxu0 0
        %400 = vmatprep.subr.bf16.mxu0 0
        %401 = vmatpush1.bf16.msra.mxu0 0
        %402 = vmatprep.subr.bf16.mxu0 0
        %403 = vmatpush1.bf16.msra.mxu0 0
        %404 = vmatprep.subr.bf16.mxu0 0
        %405 = vmatpush1.bf16.msra.mxu0 0
        %406 = vmatprep.mubr.bf16.mxu0 0
        %407 = vmatmul.mubr.bf16.gmra.mrb[0].mxu0 %v351
        %v408 = vpop.f32.mrb[0].mxu0
        %v409 = vadd.f32 0.0, %v408
        %v410 = vpop.f32.mrb[0].mxu0
        %v411 = vpop.f32.mrb[0].mxu0
        %v412 = vadd.f32 0.0, %v411
        %v413 = vpop.f32.mrb[0].mxu0
        %414 = vmatprep.mubr.bf16.mxu0 0
        %415 = vmatmul.mubr.bf16.gmra.mrb[0].mxu0 %v354
        %v416 = vpop.f32.mrb[0].mxu0
        %v417 = vadd.f32 0.0, %v416
        %v418 = vpop.f32.mrb[0].mxu0
        %v419 = vpop.f32.mrb[0].mxu0
        %v420 = vadd.f32 0.0, %v419
        %v421 = vpop.f32.mrb[0].mxu0
        %422 = vmatprep.mubr.bf16.mxu0 0
        %423 = vmatmul.mubr.bf16.gmra.mrb[0].mxu0 %v357
        %v424 = vpop.f32.mrb[0].mxu0
        %v425 = vadd.f32 0.0, %v424
        %v426 = vpop.f32.mrb[0].mxu0
        %v427 = vpop.f32.mrb[0].mxu0
        %v428 = vadd.f32 0.0, %v427
        %v429 = vpop.f32.mrb[0].mxu0
        %430 = vmatprep.mubr.bf16.mxu0 0
        %431 = vmatmul.mubr.bf16.gmra.mrb[0].mxu0 %v360
        %v432 = vpop.f32.mrb[0].mxu0
        %v433 = vadd.f32 0.0, %v432
        %v434 = vpop.f32.mrb[0].mxu0
        %v435 = vpop.f32.mrb[0].mxu0
        %v436 = vadd.f32 0.0, %v435
        %v437 = vpop.f32.mrb[0].mxu0
        %438 = vmatprep.mubr.bf16.mxu0 0
        %439 = vmatmul.mubr.bf16.gmra.mrb[0].mxu0 %v363
        %v440 = vpop.f32.mrb[0].mxu0
        %v441 = vadd.f32 0.0, %v440
        %v442 = vpop.f32.mrb[0].mxu0
        %v443 = vpop.f32.mrb[0].mxu0
        %v444 = vadd.f32 0.0, %v443
        %v445 = vpop.f32.mrb[0].mxu0
        %446 = vmatprep.mubr.bf16.mxu0 0
        %447 = vmatmul.mubr.bf16.gmra.mrb[0].mxu0 %v366
        %v448 = vpop.f32.mrb[0].mxu0
        %v449 = vadd.f32 0.0, %v448
        %v450 = vpop.f32.mrb[0].mxu0
        %v451 = vpop.f32.mrb[0].mxu0
        %v452 = vadd.f32 0.0, %v451
        %v453 = vpop.f32.mrb[0].mxu0
        %454 = vmatprep.mubr.bf16.mxu0 0
        %455 = vmatmul.mubr.bf16.gmra.mrb[0].mxu0 %v369
        %v456 = vpop.f32.mrb[0].mxu0
        %v457 = vadd.f32 0.0, %v456
        %v458 = vpop.f32.mrb[0].mxu0
        %v459 = vpop.f32.mrb[0].mxu0
        %v460 = vadd.f32 0.0, %v459
        %v461 = vpop.f32.mrb[0].mxu0
        %462 = vmatprep.mubr.bf16.mxu0 0
        %463 = vmatmul.mubr.bf16.gmra.mrb[0].mxu0 %v372
        %v464 = vpop.f32.mrb[0].mxu0
        %v465 = vadd.f32 0.0, %v464
        %v466 = vpop.f32.mrb[0].mxu0
        %v467 = vpop.f32.mrb[0].mxu0
        %v468 = vadd.f32 0.0, %v467
        %v469 = vpop.f32.mrb[0].mxu0
        %470 = vdwg.mxu0
        %v471 = vmax.f32 %v409, %v425
        %v472 = vmax.f32 %v412, %v428
        %v473 = vmax.f32 %v417, %v433
        %v474 = vmax.f32 %v420, %v436
        %v475 = vmax.f32 %v471, %v441
        %v476 = vmax.f32 %v472, %v444
        %v477 = vmax.f32 %v473, %v449
        %v478 = vmax.f32 %v474, %v452
        %v479 = vmax.f32 %v475, %v457
        %v480 = vmax.f32 %v476, %v460
        %v481 = vmax.f32 %v477, %v465
        %v482 = vmax.f32 %v478, %v468
        %v483 = vmax.f32 %v479, %v480
        %v484 = vmax.f32 %v481, %v482
        %v485 = vmax.f32 %v483, %v484
        %v486 = vrot.slane %v485, 4
        %v487 = vmax.f32 %v485, %v486
        %v488 = vrot.slane %v487, 2
        %v489 = vmax.f32 %v487, %v488
        %v490 = vrot.slane %v489, 1
        %v491 = vmax.f32 %v489, %v490
        %v492 = vsub.f32 %v409, %v491
        %v493 = vsub.f32 %v412, %v491
        %v494 = vsub.f32 %v417, %v491
        %v495 = vsub.f32 %v420, %v491
        %v496 = vsub.f32 %v425, %v491
        %v497 = vsub.f32 %v428, %v491
        %v498 = vsub.f32 %v433, %v491
        %v499 = vsub.f32 %v436, %v491
        %v500 = vsub.f32 %v441, %v491
        %v501 = vsub.f32 %v444, %v491
        %v502 = vsub.f32 %v449, %v491
        %v503 = vsub.f32 %v452, %v491
        %v504 = vsub.f32 %v457, %v491
        %v505 = vsub.f32 %v460, %v491
        %v506 = vsub.f32 %v465, %v491
        %v507 = vsub.f32 %v468, %v491
        %v508 = vmul.f32 %v492, 1.442695
        %v509 = vpow.pop %v508
        %v510 = vmul.f32 %v493, 1.442695
        %v511 = vpow.pop %v510
        %v512 = vmul.f32 %v494, 1.442695
        %v513 = vpow.pop %v512
        %v514 = vmul.f32 %v495, 1.442695
        %v515 = vpow.pop %v514
        %v516 = vmul.f32 %v496, 1.442695
        %v517 = vpow.pop %v516
        %v518 = vmul.f32 %v497, 1.442695
        %v519 = vpow.pop %v518
        %v520 = vmul.f32 %v498, 1.442695
        %v521 = vpow.pop %v520
        %v522 = vmul.f32 %v499, 1.442695
        %v523 = vpow.pop %v522
        %v524 = vmul.f32 %v500, 1.442695
        %v525 = vpow.pop %v524
        %v526 = vmul.f32 %v501, 1.442695
        %v527 = vpow.pop %v526
        %v528 = vmul.f32 %v502, 1.442695
        %v529 = vpow.pop %v528
        %v530 = vmul.f32 %v503, 1.442695
        %v531 = vpow.pop %v530
        %v532 = vmul.f32 %v504, 1.442695
        %v533 = vpow.pop %v532
        %v534 = vmul.f32 %v505, 1.442695
        %v535 = vpow.pop %v534
        %v536 = vmul.f32 %v506, 1.442695
        %v537 = vpow.pop %v536
        %v538 = vmul.f32 %v507, 1.442695
        %v539 = vpow.pop %v538
        %v540 = vpack.c.bf16 %v511, %v509
        %v541 = vpack.c.bf16 %v515, %v513
        %v542 = vpack.c.bf16 %v519, %v517
        %v543 = vpack.c.bf16 %v523, %v521
        %v544 = vpack.c.bf16 %v527, %v525
        %v545 = vpack.c.bf16 %v531, %v529
        %v546 = vpack.c.bf16 %v535, %v533
        %v547 = vpack.c.bf16 %v539, %v537
        %v553 = vunpack.c.l.b16 %v304
        %v554 = vunpack.c.l.b16 %v305
        %v555 = vunpack.c.l.b16 %v306
        %v556 = vunpack.c.l.b16 %v307
        %v557 = vunpack.c.l.b16 %v308
        %v558 = vpack.c.b16 %v554, %v553
        %v559 = vpack.c.b16 %v556, %v555
        %v560 = vpack.c.b16 %v557, %v557
        %564 = vmatprep.subr.bf16.mxu0 0
        %565 = vmatpush1.bf16.msra.mxu0 %v540
        %566 = vmatprep.subr.bf16.mxu0 0
        %567 = vmatpush1.bf16.msra.mxu0 %v541
        %568 = vmatprep.subr.bf16.mxu0 0
        %569 = vmatpush1.bf16.msra.mxu0 %v542
        %570 = vmatprep.subr.bf16.mxu0 0
        %571 = vmatpush1.bf16.msra.mxu0 %v543
        %572 = vmatprep.subr.bf16.mxu0 0
        %573 = vmatpush1.bf16.msra.mxu0 %v544
        %574 = vmatprep.subr.bf16.mxu0 0
        %575 = vmatpush1.bf16.msra.mxu0 %v545
        %576 = vmatprep.subr.bf16.mxu0 0
        %577 = vmatpush1.bf16.msra.mxu0 %v546
        %578 = vmatprep.subr.bf16.mxu0 0
        %579 = vmatpush1.bf16.msra.mxu0 %v547
        %580 = vmatprep.subr.bf16.mxu0 0
        %581 = vmatpush1.bf16.msra.mxu0 0
        %582 = vmatprep.subr.bf16.mxu0 0
        %583 = vmatpush1.bf16.msra.mxu0 0
        %584 = vmatprep.subr.bf16.mxu0 0
        %585 = vmatpush1.bf16.msra.mxu0 0
        %586 = vmatprep.subr.bf16.mxu0 0
        %587 = vmatpush1.bf16.msra.mxu0 0
        %588 = vmatprep.subr.bf16.mxu0 0
        %589 = vmatpush1.bf16.msra.mxu0 0
        %590 = vmatprep.subr.bf16.mxu0 0
        %591 = vmatpush1.bf16.msra.mxu0 0
        %592 = vmatprep.subr.bf16.mxu0 0
        %593 = vmatpush1.bf16.msra.mxu0 0
        %594 = vmatprep.subr.bf16.mxu0 0
        %595 = vmatpush1.bf16.msra.mxu0 0
        %596 = vmatprep.mubr.bf16.mxu0 0
        %597 = vmatmul.mubr.bf16.gmra.mrb[0].mxu0 %v558
        %v598 = vpop.f32.mrb[0].mxu0
        %v599 = vadd.f32 0.0, %v598
        %v600 = vpop.f32.mrb[0].mxu0
        %v601 = vpop.f32.mrb[0].mxu0
        %v602 = vadd.f32 0.0, %v601
        %v603 = vpop.f32.mrb[0].mxu0
        %604 = vmatprep.mubr.bf16.mxu0 0
        %605 = vmatmul.mubr.bf16.gmra.mrb[0].mxu0 %v559
        %v606 = vpop.f32.mrb[0].mxu0
        %v607 = vadd.f32 0.0, %v606
        %v608 = vpop.f32.mrb[0].mxu0
        %v609 = vpop.f32.mrb[0].mxu0
        %v610 = vadd.f32 0.0, %v609
        %v611 = vpop.f32.mrb[0].mxu0
        %612 = vmatprep.mubr.bf16.mxu0 0
        %613 = vmatmul.mubr.bf16.gmra.mrb[0].mxu0 %v560
        %v614 = vpop.f32.mrb[0].mxu0
        %v615 = vadd.f32 0.0, %v614
        %v616 = vpop.f32.mrb[0].mxu0
        %v617 = vpop.f32.mrb[0].mxu0
        %v618 = vpop.f32.mrb[0].mxu0
        %619 = vdwg.mxu0
        %v620 = vrcp.pop %v615
        %v621 = vlaneseq
        %v622 = vshrl.u32 %v621, 7
        %v623 = vsub.s32 0, %v622
        %v624 = vrot.slane %v620, %v623
        %v625 = vmul.f32 %v599, %v624
        %v626 = vmul.f32 %v602, %v624
        %v627 = vmul.f32 %v607, %v624
        %v628 = vmul.f32 %v610, %v624
        %v629 = vld [vmem:[%s272] sm:$0xff]
        %v630 = vld [vmem:[%s272 + $0x8] sm:$0xff]
        %v631 = vld [vmem:[%s272 + $0x10] sm:$0xff]
        %v632 = vld [vmem:[%s272 + $0x18] sm:$0xff]
        %v633 = vadd.f32 %v625, %v629
        %v634 = vadd.f32 %v626, %v630
        %v635 = vadd.f32 %v627, %v631
        %v636 = vadd.f32 %v628, %v632
        %637 = vst [vmem:[%s253] sm:$0xff] %v633
        %638 = vst [vmem:[%s253 + $0x8] sm:$0xff] %v634
        %639 = vst [vmem:[%s253 + $0x10] sm:$0xff] %v635
        %640 = vst [vmem:[%s253 + $0x18] sm:$0xff] %v636
        %641 = vadd.xlane.f32.xlu0 %v633
        %v642 = vpop.xlane.xlu0 %641
        %643 = vadd.xlane.f32.xlu0 %v634
        %v644 = vpop.xlane.xlu0 %643
        %645 = vadd.xlane.f32.xlu0 %v635
        %v646 = vpop.xlane.xlu0 %645
        %647 = vadd.xlane.f32.xlu0 %v636
        %v648 = vpop.xlane.xlu0 %647
        %v649 = vmul.f32 %v633, %v633
        %v650 = vmul.f32 %v634, %v634
        %v651 = vmul.f32 %v635, %v635
        %v652 = vmul.f32 %v636, %v636
        %653 = vadd.xlane.f32.xlu0 %v649
        %v654 = vpop.xlane.xlu0 %653
        %655 = vadd.xlane.f32.xlu0 %v650
        %v656 = vpop.xlane.xlu0 %655
        %657 = vadd.xlane.f32.xlu0 %v651
        %v658 = vpop.xlane.xlu0 %657
        %659 = vadd.xlane.f32.xlu0 %v652
        %v660 = vpop.xlane.xlu0 %659
        %vm661 = vcmask 7168
        %v662 = vsel %vm661, %v642, %v654
        %v663 = vsel %vm661, %v644, %v656
        %v664 = vsel %vm661, %v646, %v658
        %v665 = vsel %vm661, %v648, %v660
        %vm666 = vcmask 15360
        %667 = vst.msk [vmem:[%s294] sm:$0xff] %vm666, %v662
        %668 = vst.msk [vmem:[%s294 + $0x8] sm:$0xff] %vm666, %v663
        %669 = vst.msk [vmem:[%s294 + $0x10] sm:$0xff] %vm666, %v664
        %670 = vst.msk [vmem:[%s294 + $0x18] sm:$0xff] %vm666, %v665
        %s671 = sand.u32 %s123, 1
        %s672 = scalar_lea.sflag [#allocation3], %s671
        %s673 = sand.u32 %s123, 1
        %s674 = smul.addr %s673, 32
        %s675 = scalar_lea.vmem [#allocation2], %s674
        %p676 = scmp.lt.s32.totalorder %s23, 1
        %s677 = scalar_select %p676, %s23, 1
        %p678 = scmp.lt.s32.totalorder %s24, 0
        %s679 = scalar_select %p678, %s24, 0
        %s680 = smul.addr %s679, 4
        %s681 = smul.addr %s677, 4
        %s682 = sadd.s32 %s680, %s681
        %s683 = smul.addr %s682, 8
        %s684 = scalar_lea.vmem %s4, %s683
        // Predicated region
        $region33: #{offset_attention.4} parent=31 // pred_check
          %p685 = pneg %p133
        $region34: #{offset_attention.4} parent=31 // pred_check_branch
          %687 = sbr.rel (%p685) target = $region36
        $region35: #{offset_attention.4} parent=31 // pred_region
          %s689 = ssub.s32 512, 512
          %690 = vsyncadd %s672, %s689
          %s691 = smul.addr %s23, 4
          %s692 = sadd.s32 %s24, %s691
          %s693 = smul.addr %s692, 128
          %s694 = scalar_lea.hbm %s3, %s693
          %s695 = sshll.u32 %s675, 4
          %s696 = int_to_ptr.vmem [resolvable:$true] %s695
          %701 = dma.vmem_to_hbm [thread:$0]  %s696, 512, %s694, %s672, 128, 128, 8
        $region36: #{offset_attention.4} parent=31 // pred_fallthru
          _
        // Predicated region
        $region37: #{offset_attention.4} parent=31 // pred_check
          %p702 = pneg %p161
        $region38: #{offset_attention.4} parent=31 // pred_check_branch
          %704 = sbr.rel (%p702) target = $region40
        $region39: #{offset_attention.4} parent=31 // pred_region
          _
        $region40: #{offset_attention.4} parent=31 // pred_fallthru
          _
      $region32: #{offset_attention.4} parent=5 // pred_fallthru
        _
      %p705 = scmp.le.s32.totalorder 2, %s14
      // Predicated region
      $region41: #{offset_attention.4} parent=5 // pred_check
        %p706 = pneg %p705
      $region42: #{offset_attention.4} parent=5 // pred_check_branch
        %708 = sbr.rel (%p706) target = $region44
      $region43: #{offset_attention.4} parent=5 // pred_region
        %s709 = ssub.s32 %s14, 2
        // Predicated region
        $region45: #{offset_attention.4} parent=43 // pred_check
          %p710 = pneg %p139
        $region46: #{offset_attention.4} parent=43 // pred_check_branch
          %712 = sbr.rel (%p710) target = $region48
        $region47: #{offset_attention.4} parent=43 // pred_region
          %s713 = sand.u32 %s124, 1
          %s714 = scalar_lea.sflag [#allocation3], %s713
          %s715 = sand.u32 %s124, 1
          %s716 = smul.addr %s715, 32
          %s717 = scalar_lea.vmem [#allocation2], %s716
          %718 = dma.done %s714, 512
        $region48: #{offset_attention.4} parent=43 // pred_fallthru
          _
        // Predicated region
        $region49: #{offset_attention.4} parent=43 // pred_check
          %p719 = pneg %p167
        $region50: #{offset_attention.4} parent=43 // pred_check_branch
          %721 = sbr.rel (%p719) target = $region52
        $region51: #{offset_attention.4} parent=43 // pred_region
          %p722 = scmp.lt.s32.totalorder %s25, 1
          %s723 = scalar_select %p722, %s25, 1
          %p724 = scmp.lt.s32.totalorder %s26, 0
          %s725 = scalar_select %p724, %s26, 0
          %s726 = smul.addr %s725, 4
          %s727 = smul.addr %s723, 4
          %s728 = sadd.s32 %s726, %s727
          %s729 = smul.addr %s728, 8
          %s730 = scalar_lea.vmem %s4, %s729
        $region52: #{offset_attention.4} parent=43 // pred_fallthru
          _
      $region44: #{offset_attention.4} parent=5 // pred_fallthru
        _
    $region6: #{offset_attention.4} parent=1 // loop_footer
      %s18 = sadd.s32 1, %s14
    $region7: #{offset_attention.4} parent=1 // loop_footer_branch
      %13 = sbr.rel target = $region3
    $region8: #{offset_attention.4} parent=1 // loop_exit
      _
    %731 = vsyncpa [#allocation3], 1
    %s732 = scalar_lea.sflag [#allocation3], 1
    %733 = vsyncpa %s732, 1

// kernel: offset_attention.3
$region0: #{offset_attention.3}
  #allocation0 [shape = 'u32[]', space=smem, size = 0x4, offset = 0x4, fixed_abs, tag = 'smem constant byte address 0x4 - core index']
  #allocation1 [shape = 'u32[144,128]{1,0:T(1,128)}', space=vmem, size = 0x12000, scoped, tag = 'internal scratch']
  %s0 = inlined_call_operand.vmem [shape: f32[2,32,128], index: 0, kind: input, shape index: {}]
  %s1 = inlined_call_operand.vmem [shape: f32[2,3,128], index: 1, kind: input, shape index: {}]
  %s2 = inlined_call_operand.vmem [shape: bf16[96,32], index: 2, kind: input, shape index: {}]
  %s3 = inlined_call_operand.vmem [shape: f32[96,1], index: 3, kind: input, shape index: {}]
  %s4 = inlined_call_operand.vmem [shape: f32[32,3], index: 4, kind: input, shape index: {}]
  %s5 = inlined_call_operand.vmem [shape: bf16[2,32,128], index: 5, kind: output, shape index: {0}]
  %s6 = inlined_call_operand.vmem [shape: bf16[2,65,128], index: 6, kind: output, shape index: {1}]
  %7 = xla_tuple %s5, %s6
  %s8 = sld [smem:[#allocation0]]
  $region61: #{offset_attention.3} parent=0
    _
  %s10 = ssub.s32 1, %s8
  %s11 = scalar_select 0, %s10, %s8
  loop: start=0, step=1, limit=4
  $region2: #{offset_attention.3} parent=0 // loop_pre_header
    _
  $region3: #{offset_attention.3} parent=0 // loop_header
    %s13 = sphi 0, %s17
    %p14 = scmp.ge.s32.totalorder %s13, 4
    %s23 = sphi 0, %s25
    %s26 = sphi 0, %s23
    %s27 = sphi 0, %s26
    %s43 = sphi 0, %s27
    %s49 = sphi 0, %s51
    %s52 = sphi 0, %s49
    %s53 = sphi 0, %s52
    %s69 = sphi 0, %s53
    %s73 = sphi 0, %s73
    %s75 = sphi 0, %s73
    %s76 = sphi 0, %s75
    %s90 = sphi 0, %s76
    %s94 = sphi 0, %s94
    %s96 = sphi 0, %s94
    %s97 = sphi 0, %s96
    %s111 = sphi 0, %s97
    %s115 = sphi 0, %s115
    %s117 = sphi 0, %s115
    %s118 = sphi 0, %s117
    %s132 = sphi 0, %s118
    %s138 = sphi 0, %s140
    %s141 = sphi 0, %s138
    %s142 = sphi 0, %s141
    %s158 = sphi 0, %s142
    %s164 = sphi 0, %s166
    %s167 = sphi 0, %s164
    %s168 = sphi 0, %s167
    %s184 = sphi 0, %s168
  $region4: #{offset_attention.3} parent=0 // loop_header_branch
    %16 = sbr.rel (%p14) target = $region8
  $region5: #{offset_attention.3} parent=0 // loop_body
    %s18 = ssub.s32 %s13, 1
    %s19 = ssub.s32 %s13, 2
    %s20 = sadd.s32 %s13, 1
    %s21 = ssub.s32 %s13, %s20
    %p22 = scmp.eq.s32.totalorder %s21, 0
    %s24 = sadd.s32 %s23, 1
    %s25 = scalar_select %p22, %s23, %s24
    %p28 = pneg %p22
    %p29 = scmp.eq.s32.totalorder %s13, 1
    %p30 = por %p28, %p29
    %p31 = scmp.ne.s32.totalorder %s23, %s26
    %p32 = scmp.eq.s32.totalorder %s13, 0
    %p33 = por %p31, %p32
    %p34 = scmp.ne.s32.totalorder %s23, %s26
    %p35 = scmp.eq.s32.totalorder %s18, 1
    %p36 = por %p34, %p35
    %p37 = scmp.ne.s32.totalorder %s26, %s27
    %p38 = scmp.eq.s32.totalorder %s18, 0
    %p39 = por %p37, %p38
    %p40 = scmp.ne.s32.totalorder %s26, %s27
    %p41 = scmp.eq.s32.totalorder %s19, 1
    %p42 = por %p40, %p41
    %p44 = scmp.ne.s32.totalorder %s27, %s43
    %p45 = scmp.eq.s32.totalorder %s19, 0
    %p46 = por %p44, %p45
    %s47 = ssub.s32 %s13, %s20
    %p48 = scmp.eq.s32.totalorder %s47, 0
    %s50 = sadd.s32 %s49, 1
    %s51 = scalar_select %p48, %s49, %s50
    %p54 = pneg %p48
    %p55 = scmp.eq.s32.totalorder %s13, 1
    %p56 = por %p54, %p55
    %p57 = scmp.ne.s32.totalorder %s49, %s52
    %p58 = scmp.eq.s32.totalorder %s13, 0
    %p59 = por %p57, %p58
    %p60 = scmp.ne.s32.totalorder %s49, %s52
    %p61 = scmp.eq.s32.totalorder %s18, 1
    %p62 = por %p60, %p61
    %p63 = scmp.ne.s32.totalorder %s52, %s53
    %p64 = scmp.eq.s32.totalorder %s18, 0
    %p65 = por %p63, %p64
    %p66 = scmp.ne.s32.totalorder %s52, %s53
    %p67 = scmp.eq.s32.totalorder %s19, 1
    %p68 = por %p66, %p67
    %p70 = scmp.ne.s32.totalorder %s53, %s69
    %p71 = scmp.eq.s32.totalorder %s19, 0
    %p72 = por %p70, %p71
    %s74 = sadd.s32 %s73, 1
    %p77 = scmp.eq.s32.totalorder %s13, 1
    %p78 = scmp.ne.s32.totalorder %s73, %s75
    %p79 = scmp.eq.s32.totalorder %s13, 0
    %p80 = por %p78, %p79
    %p81 = scmp.ne.s32.totalorder %s73, %s75
    %p82 = scmp.eq.s32.totalorder %s18, 1
    %p83 = por %p81, %p82
    %p84 = scmp.ne.s32.totalorder %s75, %s76
    %p85 = scmp.eq.s32.totalorder %s18, 0
    %p86 = por %p84, %p85
    %p87 = scmp.ne.s32.totalorder %s75, %s76
    %p88 = scmp.eq.s32.totalorder %s19, 1
    %p89 = por %p87, %p88
    %p91 = scmp.ne.s32.totalorder %s76, %s90
    %p92 = scmp.eq.s32.totalorder %s19, 0
    %p93 = por %p91, %p92
    %s95 = sadd.s32 %s94, 1
    %p98 = scmp.eq.s32.totalorder %s13, 1
    %p99 = scmp.ne.s32.totalorder %s94, %s96
    %p100 = scmp.eq.s32.totalorder %s13, 0
    %p101 = por %p99, %p100
    %p102 = scmp.ne.s32.totalorder %s94, %s96
    %p103 = scmp.eq.s32.totalorder %s18, 1
    %p104 = por %p102, %p103
    %p105 = scmp.ne.s32.totalorder %s96, %s97
    %p106 = scmp.eq.s32.totalorder %s18, 0
    %p107 = por %p105, %p106
    %p108 = scmp.ne.s32.totalorder %s96, %s97
    %p109 = scmp.eq.s32.totalorder %s19, 1
    %p110 = por %p108, %p109
    %p112 = scmp.ne.s32.totalorder %s97, %s111
    %p113 = scmp.eq.s32.totalorder %s19, 0
    %p114 = por %p112, %p113
    %s116 = sadd.s32 %s115, 1
    %p119 = scmp.eq.s32.totalorder %s13, 1
    %p120 = scmp.ne.s32.totalorder %s115, %s117
    %p121 = scmp.eq.s32.totalorder %s13, 0
    %p122 = por %p120, %p121
    %p123 = scmp.ne.s32.totalorder %s115, %s117
    %p124 = scmp.eq.s32.totalorder %s18, 1
    %p125 = por %p123, %p124
    %p126 = scmp.ne.s32.totalorder %s117, %s118
    %p127 = scmp.eq.s32.totalorder %s18, 0
    %p128 = por %p126, %p127
    %p129 = scmp.ne.s32.totalorder %s117, %s118
    %p130 = scmp.eq.s32.totalorder %s19, 1
    %p131 = por %p129, %p130
    %p133 = scmp.ne.s32.totalorder %s118, %s132
    %p134 = scmp.eq.s32.totalorder %s19, 0
    %p135 = por %p133, %p134
    %s136 = ssub.s32 %s13, %s20
    %p137 = scmp.eq.s32.totalorder %s136, 0
    %s139 = sadd.s32 %s138, 1
    %s140 = scalar_select %p137, %s138, %s139
    %p143 = pneg %p137
    %p144 = scmp.eq.s32.totalorder %s13, 1
    %p145 = por %p143, %p144
    %p146 = scmp.ne.s32.totalorder %s138, %s141
    %p147 = scmp.eq.s32.totalorder %s13, 0
    %p148 = por %p146, %p147
    %p149 = scmp.ne.s32.totalorder %s138, %s141
    %p150 = scmp.eq.s32.totalorder %s18, 1
    %p151 = por %p149, %p150
    %p152 = scmp.ne.s32.totalorder %s141, %s142
    %p153 = scmp.eq.s32.totalorder %s18, 0
    %p154 = por %p152, %p153
    %p155 = scmp.ne.s32.totalorder %s141, %s142
    %p156 = scmp.eq.s32.totalorder %s19, 1
    %p157 = por %p155, %p156
    %p159 = scmp.ne.s32.totalorder %s142, %s158
    %p160 = scmp.eq.s32.totalorder %s19, 0
    %p161 = por %p159, %p160
    %s162 = ssub.s32 %s13, %s20
    %p163 = scmp.eq.s32.totalorder %s162, 0
    %s165 = sadd.s32 %s164, 1
    %s166 = scalar_select %p163, %s164, %s165
    %p169 = pneg %p163
    %p170 = scmp.eq.s32.totalorder %s13, 1
    %p171 = por %p169, %p170
    %p172 = scmp.ne.s32.totalorder %s164, %s167
    %p173 = scmp.eq.s32.totalorder %s13, 0
    %p174 = por %p172, %p173
    %p175 = scmp.ne.s32.totalorder %s164, %s167
    %p176 = scmp.eq.s32.totalorder %s18, 1
    %p177 = por %p175, %p176
    %p178 = scmp.ne.s32.totalorder %s167, %s168
    %p179 = scmp.eq.s32.totalorder %s18, 0
    %p180 = por %p178, %p179
    %p181 = scmp.ne.s32.totalorder %s167, %s168
    %p182 = scmp.eq.s32.totalorder %s19, 1
    %p183 = por %p181, %p182
    %p185 = scmp.ne.s32.totalorder %s168, %s184
    %p186 = scmp.eq.s32.totalorder %s19, 0
    %p187 = por %p185, %p186
    %p188 = scmp.le.s32.totalorder 1, %s13
    %p189 = scmp.lt.s32.totalorder %s13, 3
    %p190 = pnand %p188, %p189
    %p191 = pneg %p190
    // Predicated region
    $region9: #{offset_attention.3} parent=5 // pred_check
      _
    $region10: #{offset_attention.3} parent=5 // pred_check_branch
      %193 = sbr.rel (%p190) target = $region12
    $region11: #{offset_attention.3} parent=5 // pred_region
      %s194 = ssub.s32 %s13, 1
      // Predicated region
      $region13: #{offset_attention.3} parent=11 // pred_check
        %p195 = pneg %p86
      $region14: #{offset_attention.3} parent=11 // pred_check_branch
        %197 = sbr.rel (%p195) target = $region16
      $region15: #{offset_attention.3} parent=11 // pred_region
        _
      $region16: #{offset_attention.3} parent=11 // pred_fallthru
        _
      // Predicated region
      $region17: #{offset_attention.3} parent=11 // pred_check
        %p198 = pneg %p107
      $region18: #{offset_attention.3} parent=11 // pred_check_branch
        %200 = sbr.rel (%p198) target = $region20
      $region19: #{offset_attention.3} parent=11 // pred_region
        _
      $region20: #{offset_attention.3} parent=11 // pred_fallthru
        _
      // Predicated region
      $region21: #{offset_attention.3} parent=11 // pred_check
        %p201 = pneg %p128
      $region22: #{offset_attention.3} parent=11 // pred_check_branch
        %203 = sbr.rel (%p201) target = $region24
      $region23: #{offset_attention.3} parent=11 // pred_region
        _
      $region24: #{offset_attention.3} parent=11 // pred_fallthru
        _
    $region12: #{offset_attention.3} parent=5 // pred_fallthru
      _
    %p204 = scmp.lt.s32.totalorder %s13, 2
    // Predicated region
    $region25: #{offset_attention.3} parent=5 // pred_check
      %p205 = pneg %p204
    $region26: #{offset_attention.3} parent=5 // pred_check_branch
      %207 = sbr.rel (%p205) target = $region28
    $region27: #{offset_attention.3} parent=5 // pred_region
      // Predicated region
      $region29: #{offset_attention.3} parent=27 // pred_check
        %p208 = pneg %p33
      $region30: #{offset_attention.3} parent=27 // pred_check_branch
        %210 = sbr.rel (%p208) target = $region32
      $region31: #{offset_attention.3} parent=27 // pred_region
        %p211 = scmp.lt.s32.totalorder %s13, 1
        %s212 = scalar_select %p211, %s13, 1
        %s213 = smul.addr %s212, 4
        %s214 = smul.addr %s213, 8
        %s215 = scalar_lea.vmem %s0, %s214
      $region32: #{offset_attention.3} parent=27 // pred_fallthru
        _
      // Predicated region
      $region33: #{offset_attention.3} parent=27 // pred_check
        %p216 = pneg %p59
      $region34: #{offset_attention.3} parent=27 // pred_check_branch
        %218 = sbr.rel (%p216) target = $region36
      $region35: #{offset_attention.3} parent=27 // pred_region
        %p219 = scmp.lt.s32.totalorder %s13, 1
        %s220 = scalar_select %p219, %s13, 1
        %s221 = smul.addr %s220, 4
        %s222 = scalar_lea.vmem %s1, %s221
      $region36: #{offset_attention.3} parent=27 // pred_fallthru
        _
    $region28: #{offset_attention.3} parent=5 // pred_fallthru
      _
    %p223 = scmp.le.s32.totalorder 1, %s13
    %p224 = scmp.lt.s32.totalorder %s13, 3
    %p225 = pnand %p223, %p224
    %p226 = pneg %p225
    // Predicated region
    $region37: #{offset_attention.3} parent=5 // pred_check
      _
    $region38: #{offset_attention.3} parent=5 // pred_check_branch
      %228 = sbr.rel (%p225) target = $region40
    $region39: #{offset_attention.3} parent=5 // pred_region
      %s229 = ssub.s32 %s13, 1
      %p230 = scmp.lt.s32.totalorder %s18, 1
      %s231 = scalar_select %p230, %s18, 1
      %s232 = smul.addr %s231, 4
      %s233 = smul.addr %s232, 8
      %s234 = scalar_lea.vmem %s0, %s233
      %p235 = pneg %p39
      %p236 = pneg %p36
      %p237 = scmp.lt.s32.totalorder %s18, 1
      %s238 = scalar_select %p237, %s18, 1
      %s239 = smul.addr %s238, 4
      %s240 = scalar_lea.vmem %s1, %s239
      %p241 = pneg %p65
      %p242 = pneg %p62
      %p243 = pneg %p86
      %p244 = pneg %p83
      %p245 = pneg %p107
      %p246 = pneg %p104
      %p247 = pneg %p128
      %p248 = pneg %p125
      %p249 = pneg %p154
      %p250 = pneg %p151
      %p251 = scmp.lt.s32.totalorder %s18, 1
      %s252 = scalar_select %p251, %s18, 1
      %s253 = smul.addr %s252, 4
      %s254 = smul.addr %s253, 4
      %s255 = scalar_lea.vmem %s5, %s254
      %p256 = pneg %p180
      %p257 = pneg %p177
      %p258 = scmp.lt.s32.totalorder %s18, 1
      %s259 = scalar_select %p258, %s18, 1
      %s260 = smul.addr %s259, 9
      %s261 = smul.addr %s260, 4
      %s262 = scalar_lea.vmem %s6, %s261
      %p263 = scmp.lt.s32.totalorder %s18, 1
      %s264 = scalar_select %p263, %s18, 1
      %s265 = smul.addr %s264, 4
      %s266 = smul.addr %s265, 8
      %s267 = scalar_lea.vmem %s0, %s266
      %p268 = scmp.lt.s32.totalorder %s18, 1
      %s269 = scalar_select %p268, %s18, 1
      %s270 = smul.addr %s269, 4
      %s271 = scalar_lea.vmem %s1, %s270
      %p272 = scmp.lt.s32.totalorder %s18, 1
      %s273 = scalar_select %p272, %s18, 1
      %s274 = smul.addr %s273, 4
      %s275 = smul.addr %s274, 4
      %s276 = scalar_lea.vmem %s5, %s275
      %p277 = scmp.lt.s32.totalorder %s18, 1
      %s278 = scalar_select %p277, %s18, 1
      %s279 = smul.addr %s278, 9
      %s280 = smul.addr %s279, 4
      %s281 = scalar_lea.vmem %s6, %s280
      %v283 = vld [vmem:[%s267] sm:$0xff]
      %v284 = vld [vmem:[%s267 + $0x8] sm:$0xff]
      %v285 = vld [vmem:[%s267 + $0x10] sm:$0xff]
      %v286 = vld [vmem:[%s267 + $0x18] sm:$0xff]
      %v287 = vld [vmem:[%s2] sm:$0xf]
      %v288 = vld [vmem:[%s2 + $0x4] sm:$0xf]
      %v289 = vld [vmem:[%s2 + $0x8] sm:$0xf]
      %v290 = vld [vmem:[%s2 + $0xc] sm:$0xf]
      %v291 = vld [vmem:[%s2 + $0x10] sm:$0xf]
      %v292 = vld [vmem:[%s2 + $0x14] sm:$0xf]
      %v293 = vld [vmem:[%s2 + $0x18] sm:$0xf]
      %v294 = vld [vmem:[%s2 + $0x1c] sm:$0xf]
      %v295 = vld [vmem:[%s2 + $0x20] sm:$0xf]
      %v296 = vld [vmem:[%s2 + $0x24] sm:$0xf]
      %v297 = vld [vmem:[%s2 + $0x28] sm:$0xf]
      %v298 = vld [vmem:[%s2 + $0x2c] sm:$0xf]
      %v299 = vpack.c.bf16 %v284, %v283
      %v300 = vpack.c.bf16 %v286, %v285
      %v301 = vld [vmem:[%s3] sm:$0xff]
      %v302 = vld [vmem:[%s3 + $0x8] sm:$0xff]
      %v303 = vld [vmem:[%s3 + $0x10] sm:$0xff]
      %v304 = vld [vmem:[%s3 + $0x18] sm:$0xff]
      %v305 = vld [vmem:[%s3 + $0x20] sm:$0xff]
      %v306 = vld [vmem:[%s3 + $0x28] sm:$0xff]
      %v307 = vld [vmem:[%s3 + $0x30] sm:$0xff]
      %v308 = vld [vmem:[%s3 + $0x38] sm:$0xff]
      %v309 = vld [vmem:[%s3 + $0x40] sm:$0xff]
      %v310 = vld [vmem:[%s3 + $0x48] sm:$0xff]
      %v311 = vld [vmem:[%s3 + $0x50] sm:$0xff]
      %v312 = vld [vmem:[%s3 + $0x58] sm:$0xff]
      %314 = vset.pattern.permute.xlu0 0
      %315 = vperm.xlu0 %314, %v301
      %v316 = vpop.permute.xlu0 %315
      %319 = vset.pattern.permute.xlu0 0
      %320 = vperm.xlu0 %319, %v302
      %v321 = vpop.permute.xlu0 %320
      %324 = vset.pattern.permute.xlu0 0
      %325 = vperm.xlu0 %324, %v303
      %v326 = vpop.permute.xlu0 %325
      %329 = vset.pattern.permute.xlu0 0
      %330 = vperm.xlu0 %329, %v304
      %v331 = vpop.permute.xlu0 %330
      %334 = vset.pattern.permute.xlu0 0
      %335 = vperm.xlu0 %334, %v305
      %v336 = vpop.permute.xlu0 %335
      %339 = vset.pattern.permute.xlu0 0
      %340 = vperm.xlu0 %339, %v306
      %v341 = vpop.permute.xlu0 %340
      %344 = vset.pattern.permute.xlu0 0
      %345 = vperm.xlu0 %344, %v307
      %v346 = vpop.permute.xlu0 %345
      %349 = vset.pattern.permute.xlu0 0
      %350 = vperm.xlu0 %349, %v308
      %v351 = vpop.permute.xlu0 %350
      %354 = vset.pattern.permute.xlu0 0
      %355 = vperm.xlu0 %354, %v309
      %v356 = vpop.permute.xlu0 %355
      %359 = vset.pattern.permute.xlu0 0
      %360 = vperm.xlu0 %359, %v310
      %v361 = vpop.permute.xlu0 %360
      %364 = vset.pattern.permute.xlu0 0
      %365 = vperm.xlu0 %364, %v311
      %v366 = vpop.permute.xlu0 %365
      %369 = vset.pattern.permute.xlu0 0
      %370 = vperm.xlu0 %369, %v312
      %v371 = vpop.permute.xlu0 %370
      %v385 = vunpack.c.l.b16 %v287
      %v386 = vunpack.c.l.b16 %v288
      %v387 = vunpack.c.l.b16 %v289
      %v388 = vunpack.c.l.b16 %v290
      %v389 = vunpack.c.l.b16 %v291
      %v390 = vunpack.c.l.b16 %v292
      %v391 = vunpack.c.l.b16 %v293
      %v392 = vunpack.c.l.b16 %v294
      %v393 = vunpack.c.l.b16 %v295
      %v394 = vunpack.c.l.b16 %v296
      %v395 = vunpack.c.l.b16 %v297
      %v396 = vunpack.c.l.b16 %v298
      %v397 = vpack.c.b16 %v386, %v385
      %v398 = vpack.c.b16 %v388, %v387
      %v399 = vpack.c.b16 %v390, %v389
      %v400 = vpack.c.b16 %v392, %v391
      %v401 = vpack.c.b16 %v394, %v393
      %v402 = vpack.c.b16 %v396, %v395
      %vm403 = vcmask 261120
      %v405 = vsel %vm403, %v397, 0
      %v408 = vsel %vm403, %v398, 0
      %v411 = vsel %vm403, %v399, 0
      %v414 = vsel %vm403, %v400, 0
      %v417 = vsel %vm403, %v401, 0
      %v420 = vsel %vm403, %v402, 0
      %422 = vmatprep.subr.bf16.mxu0 0
      %423 = vmatpush1.bf16.msra.mxu0 %v299
      %424 = vmatprep.subr.bf16.mxu0 0
      %425 = vmatpush1.bf16.msra.mxu0 %v300
      %426 = vmatprep.subr.bf16.mxu0 0
      %427 = vmatpush1.bf16.msra.mxu0 0
      %428 = vmatprep.subr.bf16.mxu0 0
      %429 = vmatpush1.bf16.msra.mxu0 0
      %430 = vmatprep.subr.bf16.mxu0 0
      %431 = vmatpush1.bf16.msra.mxu0 0
      %432 = vmatprep.subr.bf16.mxu0 0
      %433 = vmatpush1.bf16.msra.mxu0 0
      %434 = vmatprep.subr.bf16.mxu0 0
      %435 = vmatpush1.bf16.msra.mxu0 0
      %436 = vmatprep.subr.bf16.mxu0 0
      %437 = vmatpush1.bf16.msra.mxu0 0
      %438 = vmatprep.subr.bf16.mxu0 0
      %439 = vmatpush1.bf16.msra.mxu0 0
      %440 = vmatprep.subr.bf16.mxu0 0
      %441 = vmatpush1.bf16.msra.mxu0 0
      %442 = vmatprep.subr.bf16.mxu0 0
      %443 = vmatpush1.bf16.msra.mxu0 0
      %444 = vmatprep.subr.bf16.mxu0 0
      %445 = vmatpush1.bf16.msra.mxu0 0
      %446 = vmatprep.subr.bf16.mxu0 0
      %447 = vmatpush1.bf16.msra.mxu0 0
      %448 = vmatprep.subr.bf16.mxu0 0
      %449 = vmatpush1.bf16.msra.mxu0 0
      %450 = vmatprep.subr.bf16.mxu0 0
      %451 = vmatpush1.bf16.msra.mxu0 0
      %452 = vmatprep.subr.bf16.mxu0 0
      %453 = vmatpush1.bf16.msra.mxu0 0
      %454 = vmatprep.mubr.bf16.mxu0 0
      %455 = vmatmul.mubr.bf16.gmra.mrb[0].mxu0 %v405
      %v456 = vpop.f32.mrb[0].mxu0
      %v457 = vadd.f32 %v316, %v456
      %v458 = vpop.f32.mrb[0].mxu0
      %v459 = vpop.f32.mrb[0].mxu0
      %v460 = vadd.f32 %v321, %v459
      %v461 = vpop.f32.mrb[0].mxu0
      %462 = vmatprep.mubr.bf16.mxu0 0
      %463 = vmatmul.mubr.bf16.gmra.mrb[0].mxu0 %v408
      %v464 = vpop.f32.mrb[0].mxu0
      %v465 = vadd.f32 %v326, %v464
      %v466 = vpop.f32.mrb[0].mxu0
      %v467 = vpop.f32.mrb[0].mxu0
      %v468 = vadd.f32 %v331, %v467
      %v469 = vpop.f32.mrb[0].mxu0
      %470 = vmatprep.mubr.bf16.mxu0 0
      %471 = vmatmul.mubr.bf16.gmra.mrb[0].mxu0 %v411
      %v472 = vpop.f32.mrb[0].mxu0
      %v473 = vadd.f32 %v336, %v472
      %v474 = vpop.f32.mrb[0].mxu0
      %v475 = vpop.f32.mrb[0].mxu0
      %v476 = vadd.f32 %v341, %v475
      %v477 = vpop.f32.mrb[0].mxu0
      %478 = vmatprep.mubr.bf16.mxu0 0
      %479 = vmatmul.mubr.bf16.gmra.mrb[0].mxu0 %v414
      %v480 = vpop.f32.mrb[0].mxu0
      %v481 = vadd.f32 %v346, %v480
      %v482 = vpop.f32.mrb[0].mxu0
      %v483 = vpop.f32.mrb[0].mxu0
      %v484 = vadd.f32 %v351, %v483
      %v485 = vpop.f32.mrb[0].mxu0
      %486 = vmatprep.mubr.bf16.mxu0 0
      %487 = vmatmul.mubr.bf16.gmra.mrb[0].mxu0 %v417
      %v488 = vpop.f32.mrb[0].mxu0
      %v489 = vadd.f32 %v356, %v488
      %v490 = vpop.f32.mrb[0].mxu0
      %v491 = vpop.f32.mrb[0].mxu0
      %v492 = vadd.f32 %v361, %v491
      %v493 = vpop.f32.mrb[0].mxu0
      %494 = vmatprep.mubr.bf16.mxu0 0
      %495 = vmatmul.mubr.bf16.gmra.mrb[0].mxu0 %v420
      %v496 = vpop.f32.mrb[0].mxu0
      %v497 = vadd.f32 %v366, %v496
      %v498 = vpop.f32.mrb[0].mxu0
      %v499 = vpop.f32.mrb[0].mxu0
      %v500 = vadd.f32 %v371, %v499
      %v501 = vpop.f32.mrb[0].mxu0
      %502 = vdwg.mxu0
      %v503 = vld [vmem:[%s4] sm:$0xff]
      %v504 = vld [vmem:[%s4 + $0x8] sm:$0xff]
      %v505 = vld [vmem:[%s4 + $0x10] sm:$0xff]
      %v506 = vld [vmem:[%s4 + $0x18] sm:$0xff]
      %v507 = vld [vmem:[%s271] sm:$0x7]
      %509 = vset.pattern.permute.xlu0 0
      %510 = vperm.xlu0 %509, %v503
      %v511 = vpop.permute.xlu0 %510
      %514 = vset.pattern.permute.xlu0 0
      %515 = vperm.xlu0 %514, %v504
      %v516 = vpop.permute.xlu0 %515
      %519 = vset.pattern.permute.xlu0 0
      %520 = vperm.xlu0 %519, %v505
      %v521 = vpop.permute.xlu0 %520
      %524 = vset.pattern.permute.xlu0 0
      %525 = vperm.xlu0 %524, %v506
      %v526 = vpop.permute.xlu0 %525
      %v528 = vlaneseq
      %v529 = vshrl.u32 %v528, 7
      %v530 = vsub.s32 0, %v529
      %v531 = vrot.slane %v507, %v530
      %v532 = vmul.f32 %v511, %v531
      %v533 = vmul.f32 %v516, %v531
      %v534 = vmul.f32 %v521, %v531
      %v535 = vmul.f32 %v526, %v531
      %536 = vset.pattern.permute.xlu0 1
      %537 = vperm.xlu0 %536, %v503
      %v538 = vpop.permute.xlu0 %537
      %540 = vset.pattern.permute.xlu0 1
      %541 = vperm.xlu0 %540, %v504
      %v542 = vpop.permute.xlu0 %541
      %544 = vset.pattern.permute.xlu0 1
      %545 = vperm.xlu0 %544, %v505
      %v546 = vpop.permute.xlu0 %545
      %548 = vset.pattern.permute.xlu0 1
      %549 = vperm.xlu0 %548, %v506
      %v550 = vpop.permute.xlu0 %549
      %v552 = vlaneseq
      %v553 = vshrl.u32 %v552, 7
      %v554 = vsub.s32 1, %v553
      %v555 = vrot.slane %v507, %v554
      %v556 = vmul.f32 %v538, %v555
      %v557 = vmul.f32 %v542, %v555
      %v558 = vmul.f32 %v546, %v555
      %v559 = vmul.f32 %v550, %v555
      %v560 = vadd.f32 %v532, %v556
      %v561 = vadd.f32 %v533, %v557
      %v562 = vadd.f32 %v534, %v558
      %v563 = vadd.f32 %v535, %v559
      %564 = vset.pattern.permute.xlu0 2
      %565 = vperm.xlu0 %564, %v503
      %v566 = vpop.permute.xlu0 %565
      %568 = vset.pattern.permute.xlu0 2
      %569 = vperm.xlu0 %568, %v504
      %v570 = vpop.permute.xlu0 %569
      %572 = vset.pattern.permute.xlu0 2
      %573 = vperm.xlu0 %572, %v505
      %v574 = vpop.permute.xlu0 %573
      %576 = vset.pattern.permute.xlu0 2
      %577 = vperm.xlu0 %576, %v506
      %v578 = vpop.permute.xlu0 %577
      %v580 = vlaneseq
      %v581 = vshrl.u32 %v580, 7
      %v582 = vsub.s32 2, %v581
      %v583 = vrot.slane %v507, %v582
      %v584 = vmul.f32 %v566, %v583
      %v585 = vmul.f32 %v570, %v583
      %v586 = vmul.f32 %v574, %v583
      %v587 = vmul.f32 %v578, %v583
      %v588 = vadd.f32 %v560, %v584
      %v589 = vadd.f32 %v561, %v585
      %v590 = vadd.f32 %v562, %v586
      %v591 = vadd.f32 %v563, %v587
      %v592 = vpack.c.bf16 %v460, %v457
      %v593 = vpack.c.bf16 %v468, %v465
      %v596 = vunpack.c.l.b16 %v592
      %v597 = vunpack.c.h.b16 %v592
      %v598 = vunpack.c.l.b16 %v593
      %v599 = vunpack.c.h.b16 %v593
      %v600 = vpack.c.b16 %v596, %v596
      %v601 = vpack.c.b16 %v597, %v597
      %v602 = vpack.c.b16 %v598, %v598
      %v603 = vpack.c.b16 %v599, %v599
      %608 = vst [vmem:[%s276] sm:$0xf] %v600
      %609 = vst [vmem:[%s276 + $0x4] sm:$0xf] %v601
      %610 = vst [vmem:[%s276 + $0x8] sm:$0xf] %v602
      %611 = vst [vmem:[%s276 + $0xc] sm:$0xf] %v603
      %v612 = vadd.f32 %v489, %v588
      %v613 = vadd.f32 %v492, %v589
      %v614 = vadd.f32 %v497, %v590
      %v615 = vadd.f32 %v500, %v591
      %v616 = vpack.c.bf16 %v476, %v473
      %v617 = vpack.c.bf16 %v484, %v481
      %v618 = vpack.c.bf16 %v613, %v612
      %v619 = vpack.c.bf16 %v615, %v614
      %v620 = vpack.c.bf16 1.0, 1.0
      %v626 = vunpack.c.l.b16 %v616
      %v627 = vunpack.c.h.b16 %v616
      %v628 = vunpack.c.l.b16 %v617
      %v629 = vunpack.c.h.b16 %v617
      %v630 = vunpack.c.l.b16 %v618
      %v631 = vunpack.c.h.b16 %v618
      %v632 = vunpack.c.l.b16 %v619
      %v633 = vunpack.c.h.b16 %v619
      %v634 = vunpack.c.l.b16 %v620
      %v635 = vpack.c.b16 %v626, %v626
      %v636 = vpack.c.b16 %v627, %v627
      %v637 = vpack.c.b16 %v628, %v628
      %v638 = vpack.c.b16 %v629, %v629
      %v639 = vpack.c.b16 %v630, %v630
      %v640 = vpack.c.b16 %v631, %v631
      %v641 = vpack.c.b16 %v632, %v632
      %v642 = vpack.c.b16 %v633, %v633
      %v643 = vpack.c.b16 %v634, %v634
      %653 = vst [vmem:[%s281] sm:$0xf] %v635
      %654 = vst [vmem:[%s281 + $0x4] sm:$0xf] %v636
      %655 = vst [vmem:[%s281 + $0x8] sm:$0xf] %v637
      %656 = vst [vmem:[%s281 + $0xc] sm:$0xf] %v638
      %657 = vst [vmem:[%s281 + $0x10] sm:$0xf] %v639
      %658 = vst [vmem:[%s281 + $0x14] sm:$0xf] %v640
      %659 = vst [vmem:[%s281 + $0x18] sm:$0xf] %v641
      %660 = vst [vmem:[%s281 + $0x1c] sm:$0xf] %v642
      %vm661 = vcmask 1040384
      %vm662 = vsmask.f32 256
      %vm663 = vmand %vm661, %vm662
      %v664 = vld [vmem:[%s281 + $0x20] sm:$0x1]
      %v665 = vsel %vm663, %v643, %v664
      %666 = vst [vmem:[%s281 + $0x20] sm:$0x1] %v665
      %p667 = scmp.lt.s32.totalorder %s18, 1
      %s668 = scalar_select %p667, %s18, 1
      %s669 = smul.addr %s668, 4
      %s670 = smul.addr %s669, 4
      %s671 = scalar_lea.vmem %s5, %s670
      %p672 = scmp.lt.s32.totalorder %s18, 1
      %s673 = scalar_select %p672, %s18, 1
      %s674 = smul.addr %s673, 9
      %s675 = smul.addr %s674, 4
      %s676 = scalar_lea.vmem %s6, %s675
      // Predicated region
      $region41: #{offset_attention.3} parent=39 // pred_check
        %p677 = pneg %p151
      $region42: #{offset_attention.3} parent=39 // pred_check_branch
        %679 = sbr.rel (%p677) target = $region44
      $region43: #{offset_attention.3} parent=39 // pred_region
        _
      $region44: #{offset_attention.3} parent=39 // pred_fallthru
        _
      // Predicated region
      $region45: #{offset_attention.3} parent=39 // pred_check
        %p680 = pneg %p177
      $region46: #{offset_attention.3} parent=39 // pred_check_branch
        %682 = sbr.rel (%p680) target = $region48
      $region47: #{offset_attention.3} parent=39 // pred_region
        _
      $region48: #{offset_attention.3} parent=39 // pred_fallthru
        _
    $region40: #{offset_attention.3} parent=5 // pred_fallthru
      _
    %p683 = scmp.le.s32.totalorder 2, %s13
    // Predicated region
    $region49: #{offset_attention.3} parent=5 // pred_check
      %p684 = pneg %p683
    $region50: #{offset_attention.3} parent=5 // pred_check_branch
      %686 = sbr.rel (%p684) target = $region52
    $region51: #{offset_attention.3} parent=5 // pred_region
      %s687 = ssub.s32 %s13, 2
      // Predicated region
      $region53: #{offset_attention.3} parent=51 // pred_check
        %p688 = pneg %p157
      $region54: #{offset_attention.3} parent=51 // pred_check_branch
        %690 = sbr.rel (%p688) target = $region56
      $region55: #{offset_attention.3} parent=51 // pred_region
        %p691 = scmp.lt.s32.totalorder %s19, 1
        %s692 = scalar_select %p691, %s19, 1
        %s693 = smul.addr %s692, 4
        %s694 = smul.addr %s693, 4
        %s695 = scalar_lea.vmem %s5, %s694
      $region56: #{offset_attention.3} parent=51 // pred_fallthru
        _
      // Predicated region
      $region57: #{offset_attention.3} parent=51 // pred_check
        %p696 = pneg %p183
      $region58: #{offset_attention.3} parent=51 // pred_check_branch
        %698 = sbr.rel (%p696) target = $region60
      $region59: #{offset_attention.3} parent=51 // pred_region
        %p699 = scmp.lt.s32.totalorder %s19, 1
        %s700 = scalar_select %p699, %s19, 1
        %s701 = smul.addr %s700, 9
        %s702 = smul.addr %s701, 4
        %s703 = scalar_lea.vmem %s6, %s702
      $region60: #{offset_attention.3} parent=51 // pred_fallthru
        _
    $region52: #{offset_attention.3} parent=5 // pred_fallthru
      _
  $region6: #{offset_attention.3} parent=0 // loop_footer
    %s17 = sadd.s32 1, %s13
  $region7: #{offset_attention.3} parent=0 // loop_footer_branch
    %12 = sbr.rel target = $region3
  $region8: #{offset_attention.3} parent=0 // loop_exit
    _

</llo_original>
